<compile_context>
chip_gen: v5e
topology: v5e:2x2
jax: 0.10.0
libtpu: 0.0.40
codegen_flags: <defaults>
</compile_context>

<pallas_src>
import functools

import jax
import jax.numpy as jnp
import numpy as np
from jax import lax
from jax.experimental import pallas as pl
from jax.experimental.pallas import tpu as pltpu


# (dy, dx) stencil offsets in the same row-major order as the packed weight
# columns (ky = dy + 1, kx = dx + 1).
_OFFSETS = tuple((dy, dx) for dy in (-1, 0, 1) for dx in (-1, 0, 1))


def _x2conv_kernel(x_ref, m_ref, w1_ref, c1_ref, w2_ref, c2_ref, o_ref,
                   *, H, W, C_in, C_out):
    """Fused (conv3x3 + folded-BN + ReLU) x 2 on one image.

    x_ref : (C_in, H*W)      flattened input image (lane-dense)
    m_ref : (9, H*W)         0/1 border masks, one row per stencil tap
    w1_ref: (C_out, 9*C_in)  BN-folded conv1 weights, column = tap*C_in + ci
    c1_ref: (C_out, 1)       folded bias (conv bias + BN shift)
    w2_ref: (C_out, 9*C_out), c2_ref: (C_out, 1)   same for layer 2
    o_ref : (C_out, H*W)
    """
    HW = H * W

    def conv_bn_relu(inp, w_ref, c_ref, n_in):
        # Start the accumulator at the folded bias (lane broadcast).
        acc = jnp.broadcast_to(c_ref[...], (C_out, HW))
        for t, (dy, dx) in enumerate(_OFFSETS):
            off = dy * W + dx
            if off == 0:
                shifted = inp
            else:
                # shifted[:, p] == inp[:, (p + off) mod HW]  (XLU lane rotate)
                shifted = pltpu.roll(inp, (-off) % HW, axis=1)
            # Zero positions whose neighbour falls outside the image.
            win = shifted * m_ref[t:t + 1, :]
            for ci in range(n_in):
                col = t * n_in + ci
                wcol = w_ref[:, col:col + 1]           # (C_out, 1) column
                acc = acc + wcol * win[ci:ci + 1, :]   # (C_out, HW) FMA
        return jnp.maximum(acc, 0.0)

    x = x_ref[...].astype(jnp.float32)
    h = conv_bn_relu(x, w1_ref, c1_ref, C_in)          # stays in registers
    o_ref[...] = conv_bn_relu(h, w2_ref, c2_ref, C_out).astype(o_ref.dtype)


def _pack_weights(w, s):
    """Fold the BN scale into OIHW conv weights and pack as (C_out, 9*C_in)
    with column index (ky*3 + kx) * C_in + ci."""
    c_out, c_in = w.shape[0], w.shape[1]
    wf = w.astype(jnp.float32) * s.astype(jnp.float32)[:, None, None, None]
    return jnp.transpose(wf, (0, 2, 3, 1)).reshape(c_out, 9 * c_in)


def _border_masks(H, W):
    """(9, H*W) float32 0/1 masks: tap (dy,dx) is valid where the shifted
    neighbour (y+dy, x+dx) lies inside the image."""
    yy, xx = np.meshgrid(np.arange(H), np.arange(W), indexing="ij")
    masks = np.zeros((9, H * W), np.float32)
    for t, (dy, dx) in enumerate(_OFFSETS):
        valid = ((yy + dy >= 0) & (yy + dy < H) &
                 (xx + dx >= 0) & (xx + dx < W))
        masks[t] = valid.astype(np.float32).reshape(-1)
    return jnp.asarray(masks)


def x2conv_forward(x, w1, b1, g1, be1, m1, v1, w2, b2, g2, be2, m2, v2,
                   *, eps=1e-5):
    """x: (B, C_in, H, W) NCHW. Conv weights in OIHW (C_out, C_in, 3, 3).
    BatchNorm applied in inference mode with (gamma, beta, running_mean,
    running_var). Returns (B, C_out, H, W)."""
    B, C_in, H, W = x.shape
    C_out = w1.shape[0]
    HW = H * W

    # Fold BN (inference) into weights + bias:
    #   bn(conv(x, w) + b) = conv(x, s*w) + (beta + s*(b - mean)),
    #   s = gamma / sqrt(var + eps)
    s1 = g1 / jnp.sqrt(v1 + eps)
    s2 = g2 / jnp.sqrt(v2 + eps)
    c1 = (be1 + s1 * (b1 - m1)).astype(jnp.float32).reshape(C_out, 1)
    c2 = (be2 + s2 * (b2 - m2)).astype(jnp.float32).reshape(C_out, 1)
    w1p = _pack_weights(w1, s1)
    w2p = _pack_weights(w2, s2)
    masks = _border_masks(H, W)

    x_flat = x.reshape(B, C_in, HW)   # free: row-major contiguous reshape

    kernel = functools.partial(_x2conv_kernel, H=H, W=W,
                               C_in=C_in, C_out=C_out)
    rep = lambda b: (0, 0)            # weights/masks: same block every step

    out = pl.pallas_call(
        kernel,
        out_shape=jax.ShapeDtypeStruct((B, C_out, HW), x.dtype),
        grid=(B,),
        in_specs=[
            pl.BlockSpec((None, C_in, HW), lambda b: (b, 0, 0)),
            pl.BlockSpec((9, HW), rep),
            pl.BlockSpec((C_out, 9 * C_in), rep),
            pl.BlockSpec((C_out, 1), rep),
            pl.BlockSpec((C_out, 9 * C_out), rep),
            pl.BlockSpec((C_out, 1), rep),
        ],
        out_specs=pl.BlockSpec((None, C_out, HW), lambda b: (b, 0, 0)),
        compiler_params=pltpu.CompilerParams(
            dimension_semantics=("parallel",),
        ),
    )(x_flat, masks, w1p, c1, w2p, c2)
    return out.reshape(B, C_out, H, W)


def init_x2conv_params(key, in_ch, out_ch):
    """Conv params match nn.Conv2d(.,.,3,padding=1) default init (uniform
    +/- 1/sqrt(fan_in)); BN params use non-trivial deterministic values to
    exercise the inference-mode folding."""
    ks = jax.random.split(key, 12)
    k1 = 1.0 / jnp.sqrt(jnp.float32(in_ch * 9))
    w1 = jax.random.uniform(ks[0], (out_ch, in_ch, 3, 3), jnp.float32, -k1, k1)
    b1 = jax.random.uniform(ks[1], (out_ch,), jnp.float32, -k1, k1)
    k2 = 1.0 / jnp.sqrt(jnp.float32(out_ch * 9))
    w2 = jax.random.uniform(ks[2], (out_ch, out_ch, 3, 3), jnp.float32, -k2, k2)
    b2 = jax.random.uniform(ks[3], (out_ch,), jnp.float32, -k2, k2)
    g1 = 1.0 + 0.1 * jax.random.normal(ks[4], (out_ch,), jnp.float32)
    be1 = 0.1 * jax.random.normal(ks[5], (out_ch,), jnp.float32)
    m1 = 0.1 * jax.random.normal(ks[6], (out_ch,), jnp.float32)
    v1 = 1.0 + 0.5 * jax.random.uniform(ks[7], (out_ch,), jnp.float32)
    g2 = 1.0 + 0.1 * jax.random.normal(ks[8], (out_ch,), jnp.float32)
    be2 = 0.1 * jax.random.normal(ks[9], (out_ch,), jnp.float32)
    m2 = 0.1 * jax.random.normal(ks[10], (out_ch,), jnp.float32)
    v2 = 1.0 + 0.5 * jax.random.uniform(ks[11], (out_ch,), jnp.float32)
    return (w1, b1, g1, be1, m1, v1, w2, b2, g2, be2, m2, v2)


def ref_forward(x, w1, b1, g1, be1, m1, v1, w2, b2, g2, be2, m2, v2, eps=1e-5):
    def conv_bn_relu(h, w, b, g, be, m, v):
        y = lax.conv_general_dilated(
            h, w, window_strides=(1, 1), padding=((1, 1), (1, 1)),
            dimension_numbers=("NCHW", "OIHW", "NCHW"))
        y = y + b[None, :, None, None]
        y = (y - m[None, :, None, None]) * (
            g[None, :, None, None] / jnp.sqrt(v[None, :, None, None] + eps)
        ) + be[None, :, None, None]
        return jnp.maximum(y, 0.0)

    h = conv_bn_relu(x, w1, b1, g1, be1, m1, v1)
    return conv_bn_relu(h, w2, b2, g2, be2, m2, v2)


if __name__ == "__main__":
    key = jax.random.PRNGKey(0)
    k_x, k_p = jax.random.split(key)

    B, C_in, C_out, H, W = 2, 4, 4, 16, 16
    x = jax.random.normal(k_x, (B, C_in, H, W), jnp.float32)
    params = init_x2conv_params(k_p, C_in, C_out)

    out = x2conv_forward(x, *params)
    out = jax.block_until_ready(out)

    ref = ref_forward(x, *params)
    assert out.shape == (B, C_out, H, W)
    assert jnp.allclose(out, ref, atol=1e-4, rtol=1e-4)

    print("KERNEL_OK")
</pallas_src>

<mosaic_0001>
module attributes {stable_mosaic.version = 11 : i64} {
  func.func @_x2conv_kernel(%arg0: i32, %arg1: memref<1x4x256xf32, #tpu.memory_space<vmem>>, %arg2: memref<9x256xf32, #tpu.memory_space<vmem>>, %arg3: memref<4x36xf32, #tpu.memory_space<vmem>>, %arg4: memref<4x1xf32, #tpu.memory_space<vmem>>, %arg5: memref<4x36xf32, #tpu.memory_space<vmem>>, %arg6: memref<4x1xf32, #tpu.memory_space<vmem>>, %arg7: memref<1x4x256xf32, #tpu.memory_space<vmem>>) attributes {dimension_semantics = [#tpu.dimension_semantics<parallel>], iteration_bounds = array<i64: 2>, scalar_prefetch = 0 : i64, scratch_operands = 0 : i64, tpu.core_type = #tpu.core_type<tc>, window_params = [{transform_indices = @transform_0, window_bounds = array<i64: 1, 4, 256>}, {pipeline_mode = #tpu.pipeline_mode<synchronous>, transform_indices = @transform_1, window_bounds = array<i64: 9, 256>}, {pipeline_mode = #tpu.pipeline_mode<synchronous>, transform_indices = @transform_2, window_bounds = array<i64: 4, 36>}, {pipeline_mode = #tpu.pipeline_mode<synchronous>, transform_indices = @transform_3, window_bounds = array<i64: 4, 1>}, {pipeline_mode = #tpu.pipeline_mode<synchronous>, transform_indices = @transform_4, window_bounds = array<i64: 4, 36>}, {pipeline_mode = #tpu.pipeline_mode<synchronous>, transform_indices = @transform_5, window_bounds = array<i64: 4, 1>}, {transform_indices = @transform_6, window_bounds = array<i64: 1, 4, 256>}]} {
    %c0 = arith.constant 0 : index
    %c0_0 = arith.constant 0 : index
    %c0_1 = arith.constant 0 : index
    %0 = vector.load %arg1[%c0, %c0_0, %c0_1] : memref<1x4x256xf32, #tpu.memory_space<vmem>>, vector<1x4x256xf32>
    %1 = vector.shape_cast %0 : vector<1x4x256xf32> to vector<4x256xf32>
    %c0_2 = arith.constant 0 : index
    %c0_3 = arith.constant 0 : index
    %2 = vector.load %arg4[%c0_2, %c0_3] : memref<4x1xf32, #tpu.memory_space<vmem>>, vector<4x1xf32>
    %3 = vector.shape_cast %2 : vector<4x1xf32> to vector<4x1xf32>
    %4 = vector.broadcast %3 : vector<4x1xf32> to vector<4x256xf32>
    %c17_i32 = arith.constant 17 : i32
    %5 = tpu.dynamic_rotate %1 by %c17_i32 dim 1 : vector<4x256xf32>, i32 -> vector<4x256xf32>
    %c0_4 = arith.constant 0 : index
    %c0_5 = arith.constant 0 : index
    %6 = vector.load %arg2[%c0_4, %c0_5] : memref<9x256xf32, #tpu.memory_space<vmem>>, vector<1x256xf32>
    %7 = vector.broadcast %6 : vector<1x256xf32> to vector<4x256xf32>
    %8 = arith.mulf %5, %7 : vector<4x256xf32>
    %c0_6 = arith.constant 0 : index
    %c0_7 = arith.constant 0 : index
    %9 = vector.load %arg3[%c0_6, %c0_7] : memref<4x36xf32, #tpu.memory_space<vmem>>, vector<4x1xf32>
    %10 = vector.extract_strided_slice %8 {offsets = [0, 0], sizes = [1, 256], strides = [1, 1]} : vector<4x256xf32> to vector<1x256xf32>
    %11 = vector.broadcast %9 : vector<4x1xf32> to vector<4x256xf32>
    %12 = vector.broadcast %10 : vector<1x256xf32> to vector<4x256xf32>
    %13 = arith.mulf %11, %12 : vector<4x256xf32>
    %14 = arith.addf %4, %13 : vector<4x256xf32>
    %c0_8 = arith.constant 0 : index
    %c1 = arith.constant 1 : index
    %15 = vector.load %arg3[%c0_8, %c1] : memref<4x36xf32, #tpu.memory_space<vmem>>, vector<4x1xf32>
    %16 = vector.extract_strided_slice %8 {offsets = [1, 0], sizes = [1, 256], strides = [1, 1]} : vector<4x256xf32> to vector<1x256xf32>
    %17 = vector.broadcast %15 : vector<4x1xf32> to vector<4x256xf32>
    %18 = vector.broadcast %16 : vector<1x256xf32> to vector<4x256xf32>
    %19 = arith.mulf %17, %18 : vector<4x256xf32>
    %20 = arith.addf %14, %19 : vector<4x256xf32>
    %c0_9 = arith.constant 0 : index
    %c2 = arith.constant 2 : index
    %21 = vector.load %arg3[%c0_9, %c2] : memref<4x36xf32, #tpu.memory_space<vmem>>, vector<4x1xf32>
    %22 = vector.extract_strided_slice %8 {offsets = [2, 0], sizes = [1, 256], strides = [1, 1]} : vector<4x256xf32> to vector<1x256xf32>
    %23 = vector.broadcast %21 : vector<4x1xf32> to vector<4x256xf32>
    %24 = vector.broadcast %22 : vector<1x256xf32> to vector<4x256xf32>
    %25 = arith.mulf %23, %24 : vector<4x256xf32>
    %26 = arith.addf %20, %25 : vector<4x256xf32>
    %c0_10 = arith.constant 0 : index
    %c3 = arith.constant 3 : index
    %27 = vector.load %arg3[%c0_10, %c3] : memref<4x36xf32, #tpu.memory_space<vmem>>, vector<4x1xf32>
    %28 = vector.extract_strided_slice %8 {offsets = [3, 0], sizes = [1, 256], strides = [1, 1]} : vector<4x256xf32> to vector<1x256xf32>
    %29 = vector.broadcast %27 : vector<4x1xf32> to vector<4x256xf32>
    %30 = vector.broadcast %28 : vector<1x256xf32> to vector<4x256xf32>
    %31 = arith.mulf %29, %30 : vector<4x256xf32>
    %32 = arith.addf %26, %31 : vector<4x256xf32>
    %c16_i32 = arith.constant 16 : i32
    %33 = tpu.dynamic_rotate %1 by %c16_i32 dim 1 : vector<4x256xf32>, i32 -> vector<4x256xf32>
    %c1_11 = arith.constant 1 : index
    %c0_12 = arith.constant 0 : index
    %34 = vector.load %arg2[%c1_11, %c0_12] : memref<9x256xf32, #tpu.memory_space<vmem>>, vector<1x256xf32>
    %35 = vector.broadcast %34 : vector<1x256xf32> to vector<4x256xf32>
    %36 = arith.mulf %33, %35 : vector<4x256xf32>
    %c0_13 = arith.constant 0 : index
    %c4 = arith.constant 4 : index
    %37 = vector.load %arg3[%c0_13, %c4] : memref<4x36xf32, #tpu.memory_space<vmem>>, vector<4x1xf32>
    %38 = vector.extract_strided_slice %36 {offsets = [0, 0], sizes = [1, 256], strides = [1, 1]} : vector<4x256xf32> to vector<1x256xf32>
    %39 = vector.broadcast %37 : vector<4x1xf32> to vector<4x256xf32>
    %40 = vector.broadcast %38 : vector<1x256xf32> to vector<4x256xf32>
    %41 = arith.mulf %39, %40 : vector<4x256xf32>
    %42 = arith.addf %32, %41 : vector<4x256xf32>
    %c0_14 = arith.constant 0 : index
    %c5 = arith.constant 5 : index
    %43 = vector.load %arg3[%c0_14, %c5] : memref<4x36xf32, #tpu.memory_space<vmem>>, vector<4x1xf32>
    %44 = vector.extract_strided_slice %36 {offsets = [1, 0], sizes = [1, 256], strides = [1, 1]} : vector<4x256xf32> to vector<1x256xf32>
    %45 = vector.broadcast %43 : vector<4x1xf32> to vector<4x256xf32>
    %46 = vector.broadcast %44 : vector<1x256xf32> to vector<4x256xf32>
    %47 = arith.mulf %45, %46 : vector<4x256xf32>
    %48 = arith.addf %42, %47 : vector<4x256xf32>
    %c0_15 = arith.constant 0 : index
    %c6 = arith.constant 6 : index
    %49 = vector.load %arg3[%c0_15, %c6] : memref<4x36xf32, #tpu.memory_space<vmem>>, vector<4x1xf32>
    %50 = vector.extract_strided_slice %36 {offsets = [2, 0], sizes = [1, 256], strides = [1, 1]} : vector<4x256xf32> to vector<1x256xf32>
    %51 = vector.broadcast %49 : vector<4x1xf32> to vector<4x256xf32>
    %52 = vector.broadcast %50 : vector<1x256xf32> to vector<4x256xf32>
    %53 = arith.mulf %51, %52 : vector<4x256xf32>
    %54 = arith.addf %48, %53 : vector<4x256xf32>
    %c0_16 = arith.constant 0 : index
    %c7 = arith.constant 7 : index
    %55 = vector.load %arg3[%c0_16, %c7] : memref<4x36xf32, #tpu.memory_space<vmem>>, vector<4x1xf32>
    %56 = vector.extract_strided_slice %36 {offsets = [3, 0], sizes = [1, 256], strides = [1, 1]} : vector<4x256xf32> to vector<1x256xf32>
    %57 = vector.broadcast %55 : vector<4x1xf32> to vector<4x256xf32>
    %58 = vector.broadcast %56 : vector<1x256xf32> to vector<4x256xf32>
    %59 = arith.mulf %57, %58 : vector<4x256xf32>
    %60 = arith.addf %54, %59 : vector<4x256xf32>
    %c15_i32 = arith.constant 15 : i32
    %61 = tpu.dynamic_rotate %1 by %c15_i32 dim 1 : vector<4x256xf32>, i32 -> vector<4x256xf32>
    %c2_17 = arith.constant 2 : index
    %c0_18 = arith.constant 0 : index
    %62 = vector.load %arg2[%c2_17, %c0_18] : memref<9x256xf32, #tpu.memory_space<vmem>>, vector<1x256xf32>
    %63 = vector.broadcast %62 : vector<1x256xf32> to vector<4x256xf32>
    %64 = arith.mulf %61, %63 : vector<4x256xf32>
    %c0_19 = arith.constant 0 : index
    %c8 = arith.constant 8 : index
    %65 = vector.load %arg3[%c0_19, %c8] : memref<4x36xf32, #tpu.memory_space<vmem>>, vector<4x1xf32>
    %66 = vector.extract_strided_slice %64 {offsets = [0, 0], sizes = [1, 256], strides = [1, 1]} : vector<4x256xf32> to vector<1x256xf32>
    %67 = vector.broadcast %65 : vector<4x1xf32> to vector<4x256xf32>
    %68 = vector.broadcast %66 : vector<1x256xf32> to vector<4x256xf32>
    %69 = arith.mulf %67, %68 : vector<4x256xf32>
    %70 = arith.addf %60, %69 : vector<4x256xf32>
    %c0_20 = arith.constant 0 : index
    %c9 = arith.constant 9 : index
    %71 = vector.load %arg3[%c0_20, %c9] : memref<4x36xf32, #tpu.memory_space<vmem>>, vector<4x1xf32>
    %72 = vector.extract_strided_slice %64 {offsets = [1, 0], sizes = [1, 256], strides = [1, 1]} : vector<4x256xf32> to vector<1x256xf32>
    %73 = vector.broadcast %71 : vector<4x1xf32> to vector<4x256xf32>
    %74 = vector.broadcast %72 : vector<1x256xf32> to vector<4x256xf32>
    %75 = arith.mulf %73, %74 : vector<4x256xf32>
    %76 = arith.addf %70, %75 : vector<4x256xf32>
    %c0_21 = arith.constant 0 : index
    %c10 = arith.constant 10 : index
    %77 = vector.load %arg3[%c0_21, %c10] : memref<4x36xf32, #tpu.memory_space<vmem>>, vector<4x1xf32>
    %78 = vector.extract_strided_slice %64 {offsets = [2, 0], sizes = [1, 256], strides = [1, 1]} : vector<4x256xf32> to vector<1x256xf32>
    %79 = vector.broadcast %77 : vector<4x1xf32> to vector<4x256xf32>
    %80 = vector.broadcast %78 : vector<1x256xf32> to vector<4x256xf32>
    %81 = arith.mulf %79, %80 : vector<4x256xf32>
    %82 = arith.addf %76, %81 : vector<4x256xf32>
    %c0_22 = arith.constant 0 : index
    %c11 = arith.constant 11 : index
    %83 = vector.load %arg3[%c0_22, %c11] : memref<4x36xf32, #tpu.memory_space<vmem>>, vector<4x1xf32>
    %84 = vector.extract_strided_slice %64 {offsets = [3, 0], sizes = [1, 256], strides = [1, 1]} : vector<4x256xf32> to vector<1x256xf32>
    %85 = vector.broadcast %83 : vector<4x1xf32> to vector<4x256xf32>
    %86 = vector.broadcast %84 : vector<1x256xf32> to vector<4x256xf32>
    %87 = arith.mulf %85, %86 : vector<4x256xf32>
    %88 = arith.addf %82, %87 : vector<4x256xf32>
    %c1_i32 = arith.constant 1 : i32
    %89 = tpu.dynamic_rotate %1 by %c1_i32 dim 1 : vector<4x256xf32>, i32 -> vector<4x256xf32>
    %c3_23 = arith.constant 3 : index
    %c0_24 = arith.constant 0 : index
    %90 = vector.load %arg2[%c3_23, %c0_24] : memref<9x256xf32, #tpu.memory_space<vmem>>, vector<1x256xf32>
    %91 = vector.broadcast %90 : vector<1x256xf32> to vector<4x256xf32>
    %92 = arith.mulf %89, %91 : vector<4x256xf32>
    %c0_25 = arith.constant 0 : index
    %c12 = arith.constant 12 : index
    %93 = vector.load %arg3[%c0_25, %c12] : memref<4x36xf32, #tpu.memory_space<vmem>>, vector<4x1xf32>
    %94 = vector.extract_strided_slice %92 {offsets = [0, 0], sizes = [1, 256], strides = [1, 1]} : vector<4x256xf32> to vector<1x256xf32>
    %95 = vector.broadcast %93 : vector<4x1xf32> to vector<4x256xf32>
    %96 = vector.broadcast %94 : vector<1x256xf32> to vector<4x256xf32>
    %97 = arith.mulf %95, %96 : vector<4x256xf32>
    %98 = arith.addf %88, %97 : vector<4x256xf32>
    %c0_26 = arith.constant 0 : index
    %c13 = arith.constant 13 : index
    %99 = vector.load %arg3[%c0_26, %c13] : memref<4x36xf32, #tpu.memory_space<vmem>>, vector<4x1xf32>
    %100 = vector.extract_strided_slice %92 {offsets = [1, 0], sizes = [1, 256], strides = [1, 1]} : vector<4x256xf32> to vector<1x256xf32>
    %101 = vector.broadcast %99 : vector<4x1xf32> to vector<4x256xf32>
    %102 = vector.broadcast %100 : vector<1x256xf32> to vector<4x256xf32>
    %103 = arith.mulf %101, %102 : vector<4x256xf32>
    %104 = arith.addf %98, %103 : vector<4x256xf32>
    %c0_27 = arith.constant 0 : index
    %c14 = arith.constant 14 : index
    %105 = vector.load %arg3[%c0_27, %c14] : memref<4x36xf32, #tpu.memory_space<vmem>>, vector<4x1xf32>
    %106 = vector.extract_strided_slice %92 {offsets = [2, 0], sizes = [1, 256], strides = [1, 1]} : vector<4x256xf32> to vector<1x256xf32>
    %107 = vector.broadcast %105 : vector<4x1xf32> to vector<4x256xf32>
    %108 = vector.broadcast %106 : vector<1x256xf32> to vector<4x256xf32>
    %109 = arith.mulf %107, %108 : vector<4x256xf32>
    %110 = arith.addf %104, %109 : vector<4x256xf32>
    %c0_28 = arith.constant 0 : index
    %c15 = arith.constant 15 : index
    %111 = vector.load %arg3[%c0_28, %c15] : memref<4x36xf32, #tpu.memory_space<vmem>>, vector<4x1xf32>
    %112 = vector.extract_strided_slice %92 {offsets = [3, 0], sizes = [1, 256], strides = [1, 1]} : vector<4x256xf32> to vector<1x256xf32>
    %113 = vector.broadcast %111 : vector<4x1xf32> to vector<4x256xf32>
    %114 = vector.broadcast %112 : vector<1x256xf32> to vector<4x256xf32>
    %115 = arith.mulf %113, %114 : vector<4x256xf32>
    %116 = arith.addf %110, %115 : vector<4x256xf32>
    %c4_29 = arith.constant 4 : index
    %c0_30 = arith.constant 0 : index
    %117 = vector.load %arg2[%c4_29, %c0_30] : memref<9x256xf32, #tpu.memory_space<vmem>>, vector<1x256xf32>
    %118 = vector.broadcast %117 : vector<1x256xf32> to vector<4x256xf32>
    %119 = arith.mulf %1, %118 : vector<4x256xf32>
    %c0_31 = arith.constant 0 : index
    %c16 = arith.constant 16 : index
    %120 = vector.load %arg3[%c0_31, %c16] : memref<4x36xf32, #tpu.memory_space<vmem>>, vector<4x1xf32>
    %121 = vector.extract_strided_slice %119 {offsets = [0, 0], sizes = [1, 256], strides = [1, 1]} : vector<4x256xf32> to vector<1x256xf32>
    %122 = vector.broadcast %120 : vector<4x1xf32> to vector<4x256xf32>
    %123 = vector.broadcast %121 : vector<1x256xf32> to vector<4x256xf32>
    %124 = arith.mulf %122, %123 : vector<4x256xf32>
    %125 = arith.addf %116, %124 : vector<4x256xf32>
    %c0_32 = arith.constant 0 : index
    %c17 = arith.constant 17 : index
    %126 = vector.load %arg3[%c0_32, %c17] : memref<4x36xf32, #tpu.memory_space<vmem>>, vector<4x1xf32>
    %127 = vector.extract_strided_slice %119 {offsets = [1, 0], sizes = [1, 256], strides = [1, 1]} : vector<4x256xf32> to vector<1x256xf32>
    %128 = vector.broadcast %126 : vector<4x1xf32> to vector<4x256xf32>
    %129 = vector.broadcast %127 : vector<1x256xf32> to vector<4x256xf32>
    %130 = arith.mulf %128, %129 : vector<4x256xf32>
    %131 = arith.addf %125, %130 : vector<4x256xf32>
    %c0_33 = arith.constant 0 : index
    %c18 = arith.constant 18 : index
    %132 = vector.load %arg3[%c0_33, %c18] : memref<4x36xf32, #tpu.memory_space<vmem>>, vector<4x1xf32>
    %133 = vector.extract_strided_slice %119 {offsets = [2, 0], sizes = [1, 256], strides = [1, 1]} : vector<4x256xf32> to vector<1x256xf32>
    %134 = vector.broadcast %132 : vector<4x1xf32> to vector<4x256xf32>
    %135 = vector.broadcast %133 : vector<1x256xf32> to vector<4x256xf32>
    %136 = arith.mulf %134, %135 : vector<4x256xf32>
    %137 = arith.addf %131, %136 : vector<4x256xf32>
    %c0_34 = arith.constant 0 : index
    %c19 = arith.constant 19 : index
    %138 = vector.load %arg3[%c0_34, %c19] : memref<4x36xf32, #tpu.memory_space<vmem>>, vector<4x1xf32>
    %139 = vector.extract_strided_slice %119 {offsets = [3, 0], sizes = [1, 256], strides = [1, 1]} : vector<4x256xf32> to vector<1x256xf32>
    %140 = vector.broadcast %138 : vector<4x1xf32> to vector<4x256xf32>
    %141 = vector.broadcast %139 : vector<1x256xf32> to vector<4x256xf32>
    %142 = arith.mulf %140, %141 : vector<4x256xf32>
    %143 = arith.addf %137, %142 : vector<4x256xf32>
    %c255_i32 = arith.constant 255 : i32
    %144 = tpu.dynamic_rotate %1 by %c255_i32 dim 1 : vector<4x256xf32>, i32 -> vector<4x256xf32>
    %c5_35 = arith.constant 5 : index
    %c0_36 = arith.constant 0 : index
    %145 = vector.load %arg2[%c5_35, %c0_36] : memref<9x256xf32, #tpu.memory_space<vmem>>, vector<1x256xf32>
    %146 = vector.broadcast %145 : vector<1x256xf32> to vector<4x256xf32>
    %147 = arith.mulf %144, %146 : vector<4x256xf32>
    %c0_37 = arith.constant 0 : index
    %c20 = arith.constant 20 : index
    %148 = vector.load %arg3[%c0_37, %c20] : memref<4x36xf32, #tpu.memory_space<vmem>>, vector<4x1xf32>
    %149 = vector.extract_strided_slice %147 {offsets = [0, 0], sizes = [1, 256], strides = [1, 1]} : vector<4x256xf32> to vector<1x256xf32>
    %150 = vector.broadcast %148 : vector<4x1xf32> to vector<4x256xf32>
    %151 = vector.broadcast %149 : vector<1x256xf32> to vector<4x256xf32>
    %152 = arith.mulf %150, %151 : vector<4x256xf32>
    %153 = arith.addf %143, %152 : vector<4x256xf32>
    %c0_38 = arith.constant 0 : index
    %c21 = arith.constant 21 : index
    %154 = vector.load %arg3[%c0_38, %c21] : memref<4x36xf32, #tpu.memory_space<vmem>>, vector<4x1xf32>
    %155 = vector.extract_strided_slice %147 {offsets = [1, 0], sizes = [1, 256], strides = [1, 1]} : vector<4x256xf32> to vector<1x256xf32>
    %156 = vector.broadcast %154 : vector<4x1xf32> to vector<4x256xf32>
    %157 = vector.broadcast %155 : vector<1x256xf32> to vector<4x256xf32>
    %158 = arith.mulf %156, %157 : vector<4x256xf32>
    %159 = arith.addf %153, %158 : vector<4x256xf32>
    %c0_39 = arith.constant 0 : index
    %c22 = arith.constant 22 : index
    %160 = vector.load %arg3[%c0_39, %c22] : memref<4x36xf32, #tpu.memory_space<vmem>>, vector<4x1xf32>
    %161 = vector.extract_strided_slice %147 {offsets = [2, 0], sizes = [1, 256], strides = [1, 1]} : vector<4x256xf32> to vector<1x256xf32>
    %162 = vector.broadcast %160 : vector<4x1xf32> to vector<4x256xf32>
    %163 = vector.broadcast %161 : vector<1x256xf32> to vector<4x256xf32>
    %164 = arith.mulf %162, %163 : vector<4x256xf32>
    %165 = arith.addf %159, %164 : vector<4x256xf32>
    %c0_40 = arith.constant 0 : index
    %c23 = arith.constant 23 : index
    %166 = vector.load %arg3[%c0_40, %c23] : memref<4x36xf32, #tpu.memory_space<vmem>>, vector<4x1xf32>
    %167 = vector.extract_strided_slice %147 {offsets = [3, 0], sizes = [1, 256], strides = [1, 1]} : vector<4x256xf32> to vector<1x256xf32>
    %168 = vector.broadcast %166 : vector<4x1xf32> to vector<4x256xf32>
    %169 = vector.broadcast %167 : vector<1x256xf32> to vector<4x256xf32>
    %170 = arith.mulf %168, %169 : vector<4x256xf32>
    %171 = arith.addf %165, %170 : vector<4x256xf32>
    %c241_i32 = arith.constant 241 : i32
    %172 = tpu.dynamic_rotate %1 by %c241_i32 dim 1 : vector<4x256xf32>, i32 -> vector<4x256xf32>
    %c6_41 = arith.constant 6 : index
    %c0_42 = arith.constant 0 : index
    %173 = vector.load %arg2[%c6_41, %c0_42] : memref<9x256xf32, #tpu.memory_space<vmem>>, vector<1x256xf32>
    %174 = vector.broadcast %173 : vector<1x256xf32> to vector<4x256xf32>
    %175 = arith.mulf %172, %174 : vector<4x256xf32>
    %c0_43 = arith.constant 0 : index
    %c24 = arith.constant 24 : index
    %176 = vector.load %arg3[%c0_43, %c24] : memref<4x36xf32, #tpu.memory_space<vmem>>, vector<4x1xf32>
    %177 = vector.extract_strided_slice %175 {offsets = [0, 0], sizes = [1, 256], strides = [1, 1]} : vector<4x256xf32> to vector<1x256xf32>
    %178 = vector.broadcast %176 : vector<4x1xf32> to vector<4x256xf32>
    %179 = vector.broadcast %177 : vector<1x256xf32> to vector<4x256xf32>
    %180 = arith.mulf %178, %179 : vector<4x256xf32>
    %181 = arith.addf %171, %180 : vector<4x256xf32>
    %c0_44 = arith.constant 0 : index
    %c25 = arith.constant 25 : index
    %182 = vector.load %arg3[%c0_44, %c25] : memref<4x36xf32, #tpu.memory_space<vmem>>, vector<4x1xf32>
    %183 = vector.extract_strided_slice %175 {offsets = [1, 0], sizes = [1, 256], strides = [1, 1]} : vector<4x256xf32> to vector<1x256xf32>
    %184 = vector.broadcast %182 : vector<4x1xf32> to vector<4x256xf32>
    %185 = vector.broadcast %183 : vector<1x256xf32> to vector<4x256xf32>
    %186 = arith.mulf %184, %185 : vector<4x256xf32>
    %187 = arith.addf %181, %186 : vector<4x256xf32>
    %c0_45 = arith.constant 0 : index
    %c26 = arith.constant 26 : index
    %188 = vector.load %arg3[%c0_45, %c26] : memref<4x36xf32, #tpu.memory_space<vmem>>, vector<4x1xf32>
    %189 = vector.extract_strided_slice %175 {offsets = [2, 0], sizes = [1, 256], strides = [1, 1]} : vector<4x256xf32> to vector<1x256xf32>
    %190 = vector.broadcast %188 : vector<4x1xf32> to vector<4x256xf32>
    %191 = vector.broadcast %189 : vector<1x256xf32> to vector<4x256xf32>
    %192 = arith.mulf %190, %191 : vector<4x256xf32>
    %193 = arith.addf %187, %192 : vector<4x256xf32>
    %c0_46 = arith.constant 0 : index
    %c27 = arith.constant 27 : index
    %194 = vector.load %arg3[%c0_46, %c27] : memref<4x36xf32, #tpu.memory_space<vmem>>, vector<4x1xf32>
    %195 = vector.extract_strided_slice %175 {offsets = [3, 0], sizes = [1, 256], strides = [1, 1]} : vector<4x256xf32> to vector<1x256xf32>
    %196 = vector.broadcast %194 : vector<4x1xf32> to vector<4x256xf32>
    %197 = vector.broadcast %195 : vector<1x256xf32> to vector<4x256xf32>
    %198 = arith.mulf %196, %197 : vector<4x256xf32>
    %199 = arith.addf %193, %198 : vector<4x256xf32>
    %c240_i32 = arith.constant 240 : i32
    %200 = tpu.dynamic_rotate %1 by %c240_i32 dim 1 : vector<4x256xf32>, i32 -> vector<4x256xf32>
    %c7_47 = arith.constant 7 : index
    %c0_48 = arith.constant 0 : index
    %201 = vector.load %arg2[%c7_47, %c0_48] : memref<9x256xf32, #tpu.memory_space<vmem>>, vector<1x256xf32>
    %202 = vector.broadcast %201 : vector<1x256xf32> to vector<4x256xf32>
    %203 = arith.mulf %200, %202 : vector<4x256xf32>
    %c0_49 = arith.constant 0 : index
    %c28 = arith.constant 28 : index
    %204 = vector.load %arg3[%c0_49, %c28] : memref<4x36xf32, #tpu.memory_space<vmem>>, vector<4x1xf32>
    %205 = vector.extract_strided_slice %203 {offsets = [0, 0], sizes = [1, 256], strides = [1, 1]} : vector<4x256xf32> to vector<1x256xf32>
    %206 = vector.broadcast %204 : vector<4x1xf32> to vector<4x256xf32>
    %207 = vector.broadcast %205 : vector<1x256xf32> to vector<4x256xf32>
    %208 = arith.mulf %206, %207 : vector<4x256xf32>
    %209 = arith.addf %199, %208 : vector<4x256xf32>
    %c0_50 = arith.constant 0 : index
    %c29 = arith.constant 29 : index
    %210 = vector.load %arg3[%c0_50, %c29] : memref<4x36xf32, #tpu.memory_space<vmem>>, vector<4x1xf32>
    %211 = vector.extract_strided_slice %203 {offsets = [1, 0], sizes = [1, 256], strides = [1, 1]} : vector<4x256xf32> to vector<1x256xf32>
    %212 = vector.broadcast %210 : vector<4x1xf32> to vector<4x256xf32>
    %213 = vector.broadcast %211 : vector<1x256xf32> to vector<4x256xf32>
    %214 = arith.mulf %212, %213 : vector<4x256xf32>
    %215 = arith.addf %209, %214 : vector<4x256xf32>
    %c0_51 = arith.constant 0 : index
    %c30 = arith.constant 30 : index
    %216 = vector.load %arg3[%c0_51, %c30] : memref<4x36xf32, #tpu.memory_space<vmem>>, vector<4x1xf32>
    %217 = vector.extract_strided_slice %203 {offsets = [2, 0], sizes = [1, 256], strides = [1, 1]} : vector<4x256xf32> to vector<1x256xf32>
    %218 = vector.broadcast %216 : vector<4x1xf32> to vector<4x256xf32>
    %219 = vector.broadcast %217 : vector<1x256xf32> to vector<4x256xf32>
    %220 = arith.mulf %218, %219 : vector<4x256xf32>
    %221 = arith.addf %215, %220 : vector<4x256xf32>
    %c0_52 = arith.constant 0 : index
    %c31 = arith.constant 31 : index
    %222 = vector.load %arg3[%c0_52, %c31] : memref<4x36xf32, #tpu.memory_space<vmem>>, vector<4x1xf32>
    %223 = vector.extract_strided_slice %203 {offsets = [3, 0], sizes = [1, 256], strides = [1, 1]} : vector<4x256xf32> to vector<1x256xf32>
    %224 = vector.broadcast %222 : vector<4x1xf32> to vector<4x256xf32>
    %225 = vector.broadcast %223 : vector<1x256xf32> to vector<4x256xf32>
    %226 = arith.mulf %224, %225 : vector<4x256xf32>
    %227 = arith.addf %221, %226 : vector<4x256xf32>
    %c239_i32 = arith.constant 239 : i32
    %228 = tpu.dynamic_rotate %1 by %c239_i32 dim 1 : vector<4x256xf32>, i32 -> vector<4x256xf32>
    %c8_53 = arith.constant 8 : index
    %c0_54 = arith.constant 0 : index
    %229 = vector.load %arg2[%c8_53, %c0_54] : memref<9x256xf32, #tpu.memory_space<vmem>>, vector<1x256xf32>
    %230 = vector.broadcast %229 : vector<1x256xf32> to vector<4x256xf32>
    %231 = arith.mulf %228, %230 : vector<4x256xf32>
    %c0_55 = arith.constant 0 : index
    %c32 = arith.constant 32 : index
    %232 = vector.load %arg3[%c0_55, %c32] : memref<4x36xf32, #tpu.memory_space<vmem>>, vector<4x1xf32>
    %233 = vector.extract_strided_slice %231 {offsets = [0, 0], sizes = [1, 256], strides = [1, 1]} : vector<4x256xf32> to vector<1x256xf32>
    %234 = vector.broadcast %232 : vector<4x1xf32> to vector<4x256xf32>
    %235 = vector.broadcast %233 : vector<1x256xf32> to vector<4x256xf32>
    %236 = arith.mulf %234, %235 : vector<4x256xf32>
    %237 = arith.addf %227, %236 : vector<4x256xf32>
    %c0_56 = arith.constant 0 : index
    %c33 = arith.constant 33 : index
    %238 = vector.load %arg3[%c0_56, %c33] : memref<4x36xf32, #tpu.memory_space<vmem>>, vector<4x1xf32>
    %239 = vector.extract_strided_slice %231 {offsets = [1, 0], sizes = [1, 256], strides = [1, 1]} : vector<4x256xf32> to vector<1x256xf32>
    %240 = vector.broadcast %238 : vector<4x1xf32> to vector<4x256xf32>
    %241 = vector.broadcast %239 : vector<1x256xf32> to vector<4x256xf32>
    %242 = arith.mulf %240, %241 : vector<4x256xf32>
    %243 = arith.addf %237, %242 : vector<4x256xf32>
    %c0_57 = arith.constant 0 : index
    %c34 = arith.constant 34 : index
    %244 = vector.load %arg3[%c0_57, %c34] : memref<4x36xf32, #tpu.memory_space<vmem>>, vector<4x1xf32>
    %245 = vector.extract_strided_slice %231 {offsets = [2, 0], sizes = [1, 256], strides = [1, 1]} : vector<4x256xf32> to vector<1x256xf32>
    %246 = vector.broadcast %244 : vector<4x1xf32> to vector<4x256xf32>
    %247 = vector.broadcast %245 : vector<1x256xf32> to vector<4x256xf32>
    %248 = arith.mulf %246, %247 : vector<4x256xf32>
    %249 = arith.addf %243, %248 : vector<4x256xf32>
    %c0_58 = arith.constant 0 : index
    %c35 = arith.constant 35 : index
    %250 = vector.load %arg3[%c0_58, %c35] : memref<4x36xf32, #tpu.memory_space<vmem>>, vector<4x1xf32>
    %251 = vector.extract_strided_slice %231 {offsets = [3, 0], sizes = [1, 256], strides = [1, 1]} : vector<4x256xf32> to vector<1x256xf32>
    %252 = vector.broadcast %250 : vector<4x1xf32> to vector<4x256xf32>
    %253 = vector.broadcast %251 : vector<1x256xf32> to vector<4x256xf32>
    %254 = arith.mulf %252, %253 : vector<4x256xf32>
    %255 = arith.addf %249, %254 : vector<4x256xf32>
    %cst = arith.constant 0.000000e+00 : f32
    %256 = vector.broadcast %cst : f32 to vector<4x256xf32>
    %257 = arith.maximumf %255, %256 : vector<4x256xf32>
    %c0_59 = arith.constant 0 : index
    %c0_60 = arith.constant 0 : index
    %258 = vector.load %arg6[%c0_59, %c0_60] : memref<4x1xf32, #tpu.memory_space<vmem>>, vector<4x1xf32>
    %259 = vector.shape_cast %258 : vector<4x1xf32> to vector<4x1xf32>
    %260 = vector.broadcast %259 : vector<4x1xf32> to vector<4x256xf32>
    %c17_i32_61 = arith.constant 17 : i32
    %261 = tpu.dynamic_rotate %257 by %c17_i32_61 dim 1 : vector<4x256xf32>, i32 -> vector<4x256xf32>
    %c0_62 = arith.constant 0 : index
    %c0_63 = arith.constant 0 : index
    %262 = vector.load %arg2[%c0_62, %c0_63] : memref<9x256xf32, #tpu.memory_space<vmem>>, vector<1x256xf32>
    %263 = vector.broadcast %262 : vector<1x256xf32> to vector<4x256xf32>
    %264 = arith.mulf %261, %263 : vector<4x256xf32>
    %c0_64 = arith.constant 0 : index
    %c0_65 = arith.constant 0 : index
    %265 = vector.load %arg5[%c0_64, %c0_65] : memref<4x36xf32, #tpu.memory_space<vmem>>, vector<4x1xf32>
    %266 = vector.extract_strided_slice %264 {offsets = [0, 0], sizes = [1, 256], strides = [1, 1]} : vector<4x256xf32> to vector<1x256xf32>
    %267 = vector.broadcast %265 : vector<4x1xf32> to vector<4x256xf32>
    %268 = vector.broadcast %266 : vector<1x256xf32> to vector<4x256xf32>
    %269 = arith.mulf %267, %268 : vector<4x256xf32>
    %270 = arith.addf %260, %269 : vector<4x256xf32>
    %c0_66 = arith.constant 0 : index
    %c1_67 = arith.constant 1 : index
    %271 = vector.load %arg5[%c0_66, %c1_67] : memref<4x36xf32, #tpu.memory_space<vmem>>, vector<4x1xf32>
    %272 = vector.extract_strided_slice %264 {offsets = [1, 0], sizes = [1, 256], strides = [1, 1]} : vector<4x256xf32> to vector<1x256xf32>
    %273 = vector.broadcast %271 : vector<4x1xf32> to vector<4x256xf32>
    %274 = vector.broadcast %272 : vector<1x256xf32> to vector<4x256xf32>
    %275 = arith.mulf %273, %274 : vector<4x256xf32>
    %276 = arith.addf %270, %275 : vector<4x256xf32>
    %c0_68 = arith.constant 0 : index
    %c2_69 = arith.constant 2 : index
    %277 = vector.load %arg5[%c0_68, %c2_69] : memref<4x36xf32, #tpu.memory_space<vmem>>, vector<4x1xf32>
    %278 = vector.extract_strided_slice %264 {offsets = [2, 0], sizes = [1, 256], strides = [1, 1]} : vector<4x256xf32> to vector<1x256xf32>
    %279 = vector.broadcast %277 : vector<4x1xf32> to vector<4x256xf32>
    %280 = vector.broadcast %278 : vector<1x256xf32> to vector<4x256xf32>
    %281 = arith.mulf %279, %280 : vector<4x256xf32>
    %282 = arith.addf %276, %281 : vector<4x256xf32>
    %c0_70 = arith.constant 0 : index
    %c3_71 = arith.constant 3 : index
    %283 = vector.load %arg5[%c0_70, %c3_71] : memref<4x36xf32, #tpu.memory_space<vmem>>, vector<4x1xf32>
    %284 = vector.extract_strided_slice %264 {offsets = [3, 0], sizes = [1, 256], strides = [1, 1]} : vector<4x256xf32> to vector<1x256xf32>
    %285 = vector.broadcast %283 : vector<4x1xf32> to vector<4x256xf32>
    %286 = vector.broadcast %284 : vector<1x256xf32> to vector<4x256xf32>
    %287 = arith.mulf %285, %286 : vector<4x256xf32>
    %288 = arith.addf %282, %287 : vector<4x256xf32>
    %c16_i32_72 = arith.constant 16 : i32
    %289 = tpu.dynamic_rotate %257 by %c16_i32_72 dim 1 : vector<4x256xf32>, i32 -> vector<4x256xf32>
    %c1_73 = arith.constant 1 : index
    %c0_74 = arith.constant 0 : index
    %290 = vector.load %arg2[%c1_73, %c0_74] : memref<9x256xf32, #tpu.memory_space<vmem>>, vector<1x256xf32>
    %291 = vector.broadcast %290 : vector<1x256xf32> to vector<4x256xf32>
    %292 = arith.mulf %289, %291 : vector<4x256xf32>
    %c0_75 = arith.constant 0 : index
    %c4_76 = arith.constant 4 : index
    %293 = vector.load %arg5[%c0_75, %c4_76] : memref<4x36xf32, #tpu.memory_space<vmem>>, vector<4x1xf32>
    %294 = vector.extract_strided_slice %292 {offsets = [0, 0], sizes = [1, 256], strides = [1, 1]} : vector<4x256xf32> to vector<1x256xf32>
    %295 = vector.broadcast %293 : vector<4x1xf32> to vector<4x256xf32>
    %296 = vector.broadcast %294 : vector<1x256xf32> to vector<4x256xf32>
    %297 = arith.mulf %295, %296 : vector<4x256xf32>
    %298 = arith.addf %288, %297 : vector<4x256xf32>
    %c0_77 = arith.constant 0 : index
    %c5_78 = arith.constant 5 : index
    %299 = vector.load %arg5[%c0_77, %c5_78] : memref<4x36xf32, #tpu.memory_space<vmem>>, vector<4x1xf32>
    %300 = vector.extract_strided_slice %292 {offsets = [1, 0], sizes = [1, 256], strides = [1, 1]} : vector<4x256xf32> to vector<1x256xf32>
    %301 = vector.broadcast %299 : vector<4x1xf32> to vector<4x256xf32>
    %302 = vector.broadcast %300 : vector<1x256xf32> to vector<4x256xf32>
    %303 = arith.mulf %301, %302 : vector<4x256xf32>
    %304 = arith.addf %298, %303 : vector<4x256xf32>
    %c0_79 = arith.constant 0 : index
    %c6_80 = arith.constant 6 : index
    %305 = vector.load %arg5[%c0_79, %c6_80] : memref<4x36xf32, #tpu.memory_space<vmem>>, vector<4x1xf32>
    %306 = vector.extract_strided_slice %292 {offsets = [2, 0], sizes = [1, 256], strides = [1, 1]} : vector<4x256xf32> to vector<1x256xf32>
    %307 = vector.broadcast %305 : vector<4x1xf32> to vector<4x256xf32>
    %308 = vector.broadcast %306 : vector<1x256xf32> to vector<4x256xf32>
    %309 = arith.mulf %307, %308 : vector<4x256xf32>
    %310 = arith.addf %304, %309 : vector<4x256xf32>
    %c0_81 = arith.constant 0 : index
    %c7_82 = arith.constant 7 : index
    %311 = vector.load %arg5[%c0_81, %c7_82] : memref<4x36xf32, #tpu.memory_space<vmem>>, vector<4x1xf32>
    %312 = vector.extract_strided_slice %292 {offsets = [3, 0], sizes = [1, 256], strides = [1, 1]} : vector<4x256xf32> to vector<1x256xf32>
    %313 = vector.broadcast %311 : vector<4x1xf32> to vector<4x256xf32>
    %314 = vector.broadcast %312 : vector<1x256xf32> to vector<4x256xf32>
    %315 = arith.mulf %313, %314 : vector<4x256xf32>
    %316 = arith.addf %310, %315 : vector<4x256xf32>
    %c15_i32_83 = arith.constant 15 : i32
    %317 = tpu.dynamic_rotate %257 by %c15_i32_83 dim 1 : vector<4x256xf32>, i32 -> vector<4x256xf32>
    %c2_84 = arith.constant 2 : index
    %c0_85 = arith.constant 0 : index
    %318 = vector.load %arg2[%c2_84, %c0_85] : memref<9x256xf32, #tpu.memory_space<vmem>>, vector<1x256xf32>
    %319 = vector.broadcast %318 : vector<1x256xf32> to vector<4x256xf32>
    %320 = arith.mulf %317, %319 : vector<4x256xf32>
    %c0_86 = arith.constant 0 : index
    %c8_87 = arith.constant 8 : index
    %321 = vector.load %arg5[%c0_86, %c8_87] : memref<4x36xf32, #tpu.memory_space<vmem>>, vector<4x1xf32>
    %322 = vector.extract_strided_slice %320 {offsets = [0, 0], sizes = [1, 256], strides = [1, 1]} : vector<4x256xf32> to vector<1x256xf32>
    %323 = vector.broadcast %321 : vector<4x1xf32> to vector<4x256xf32>
    %324 = vector.broadcast %322 : vector<1x256xf32> to vector<4x256xf32>
    %325 = arith.mulf %323, %324 : vector<4x256xf32>
    %326 = arith.addf %316, %325 : vector<4x256xf32>
    %c0_88 = arith.constant 0 : index
    %c9_89 = arith.constant 9 : index
    %327 = vector.load %arg5[%c0_88, %c9_89] : memref<4x36xf32, #tpu.memory_space<vmem>>, vector<4x1xf32>
    %328 = vector.extract_strided_slice %320 {offsets = [1, 0], sizes = [1, 256], strides = [1, 1]} : vector<4x256xf32> to vector<1x256xf32>
    %329 = vector.broadcast %327 : vector<4x1xf32> to vector<4x256xf32>
    %330 = vector.broadcast %328 : vector<1x256xf32> to vector<4x256xf32>
    %331 = arith.mulf %329, %330 : vector<4x256xf32>
    %332 = arith.addf %326, %331 : vector<4x256xf32>
    %c0_90 = arith.constant 0 : index
    %c10_91 = arith.constant 10 : index
    %333 = vector.load %arg5[%c0_90, %c10_91] : memref<4x36xf32, #tpu.memory_space<vmem>>, vector<4x1xf32>
    %334 = vector.extract_strided_slice %320 {offsets = [2, 0], sizes = [1, 256], strides = [1, 1]} : vector<4x256xf32> to vector<1x256xf32>
    %335 = vector.broadcast %333 : vector<4x1xf32> to vector<4x256xf32>
    %336 = vector.broadcast %334 : vector<1x256xf32> to vector<4x256xf32>
    %337 = arith.mulf %335, %336 : vector<4x256xf32>
    %338 = arith.addf %332, %337 : vector<4x256xf32>
    %c0_92 = arith.constant 0 : index
    %c11_93 = arith.constant 11 : index
    %339 = vector.load %arg5[%c0_92, %c11_93] : memref<4x36xf32, #tpu.memory_space<vmem>>, vector<4x1xf32>
    %340 = vector.extract_strided_slice %320 {offsets = [3, 0], sizes = [1, 256], strides = [1, 1]} : vector<4x256xf32> to vector<1x256xf32>
    %341 = vector.broadcast %339 : vector<4x1xf32> to vector<4x256xf32>
    %342 = vector.broadcast %340 : vector<1x256xf32> to vector<4x256xf32>
    %343 = arith.mulf %341, %342 : vector<4x256xf32>
    %344 = arith.addf %338, %343 : vector<4x256xf32>
    %c1_i32_94 = arith.constant 1 : i32
    %345 = tpu.dynamic_rotate %257 by %c1_i32_94 dim 1 : vector<4x256xf32>, i32 -> vector<4x256xf32>
    %c3_95 = arith.constant 3 : index
    %c0_96 = arith.constant 0 : index
    %346 = vector.load %arg2[%c3_95, %c0_96] : memref<9x256xf32, #tpu.memory_space<vmem>>, vector<1x256xf32>
    %347 = vector.broadcast %346 : vector<1x256xf32> to vector<4x256xf32>
    %348 = arith.mulf %345, %347 : vector<4x256xf32>
    %c0_97 = arith.constant 0 : index
    %c12_98 = arith.constant 12 : index
    %349 = vector.load %arg5[%c0_97, %c12_98] : memref<4x36xf32, #tpu.memory_space<vmem>>, vector<4x1xf32>
    %350 = vector.extract_strided_slice %348 {offsets = [0, 0], sizes = [1, 256], strides = [1, 1]} : vector<4x256xf32> to vector<1x256xf32>
    %351 = vector.broadcast %349 : vector<4x1xf32> to vector<4x256xf32>
    %352 = vector.broadcast %350 : vector<1x256xf32> to vector<4x256xf32>
    %353 = arith.mulf %351, %352 : vector<4x256xf32>
    %354 = arith.addf %344, %353 : vector<4x256xf32>
    %c0_99 = arith.constant 0 : index
    %c13_100 = arith.constant 13 : index
    %355 = vector.load %arg5[%c0_99, %c13_100] : memref<4x36xf32, #tpu.memory_space<vmem>>, vector<4x1xf32>
    %356 = vector.extract_strided_slice %348 {offsets = [1, 0], sizes = [1, 256], strides = [1, 1]} : vector<4x256xf32> to vector<1x256xf32>
    %357 = vector.broadcast %355 : vector<4x1xf32> to vector<4x256xf32>
    %358 = vector.broadcast %356 : vector<1x256xf32> to vector<4x256xf32>
    %359 = arith.mulf %357, %358 : vector<4x256xf32>
    %360 = arith.addf %354, %359 : vector<4x256xf32>
    %c0_101 = arith.constant 0 : index
    %c14_102 = arith.constant 14 : index
    %361 = vector.load %arg5[%c0_101, %c14_102] : memref<4x36xf32, #tpu.memory_space<vmem>>, vector<4x1xf32>
    %362 = vector.extract_strided_slice %348 {offsets = [2, 0], sizes = [1, 256], strides = [1, 1]} : vector<4x256xf32> to vector<1x256xf32>
    %363 = vector.broadcast %361 : vector<4x1xf32> to vector<4x256xf32>
    %364 = vector.broadcast %362 : vector<1x256xf32> to vector<4x256xf32>
    %365 = arith.mulf %363, %364 : vector<4x256xf32>
    %366 = arith.addf %360, %365 : vector<4x256xf32>
    %c0_103 = arith.constant 0 : index
    %c15_104 = arith.constant 15 : index
    %367 = vector.load %arg5[%c0_103, %c15_104] : memref<4x36xf32, #tpu.memory_space<vmem>>, vector<4x1xf32>
    %368 = vector.extract_strided_slice %348 {offsets = [3, 0], sizes = [1, 256], strides = [1, 1]} : vector<4x256xf32> to vector<1x256xf32>
    %369 = vector.broadcast %367 : vector<4x1xf32> to vector<4x256xf32>
    %370 = vector.broadcast %368 : vector<1x256xf32> to vector<4x256xf32>
    %371 = arith.mulf %369, %370 : vector<4x256xf32>
    %372 = arith.addf %366, %371 : vector<4x256xf32>
    %c4_105 = arith.constant 4 : index
    %c0_106 = arith.constant 0 : index
    %373 = vector.load %arg2[%c4_105, %c0_106] : memref<9x256xf32, #tpu.memory_space<vmem>>, vector<1x256xf32>
    %374 = vector.broadcast %373 : vector<1x256xf32> to vector<4x256xf32>
    %375 = arith.mulf %257, %374 : vector<4x256xf32>
    %c0_107 = arith.constant 0 : index
    %c16_108 = arith.constant 16 : index
    %376 = vector.load %arg5[%c0_107, %c16_108] : memref<4x36xf32, #tpu.memory_space<vmem>>, vector<4x1xf32>
    %377 = vector.extract_strided_slice %375 {offsets = [0, 0], sizes = [1, 256], strides = [1, 1]} : vector<4x256xf32> to vector<1x256xf32>
    %378 = vector.broadcast %376 : vector<4x1xf32> to vector<4x256xf32>
    %379 = vector.broadcast %377 : vector<1x256xf32> to vector<4x256xf32>
    %380 = arith.mulf %378, %379 : vector<4x256xf32>
    %381 = arith.addf %372, %380 : vector<4x256xf32>
    %c0_109 = arith.constant 0 : index
    %c17_110 = arith.constant 17 : index
    %382 = vector.load %arg5[%c0_109, %c17_110] : memref<4x36xf32, #tpu.memory_space<vmem>>, vector<4x1xf32>
    %383 = vector.extract_strided_slice %375 {offsets = [1, 0], sizes = [1, 256], strides = [1, 1]} : vector<4x256xf32> to vector<1x256xf32>
    %384 = vector.broadcast %382 : vector<4x1xf32> to vector<4x256xf32>
    %385 = vector.broadcast %383 : vector<1x256xf32> to vector<4x256xf32>
    %386 = arith.mulf %384, %385 : vector<4x256xf32>
    %387 = arith.addf %381, %386 : vector<4x256xf32>
    %c0_111 = arith.constant 0 : index
    %c18_112 = arith.constant 18 : index
    %388 = vector.load %arg5[%c0_111, %c18_112] : memref<4x36xf32, #tpu.memory_space<vmem>>, vector<4x1xf32>
    %389 = vector.extract_strided_slice %375 {offsets = [2, 0], sizes = [1, 256], strides = [1, 1]} : vector<4x256xf32> to vector<1x256xf32>
    %390 = vector.broadcast %388 : vector<4x1xf32> to vector<4x256xf32>
    %391 = vector.broadcast %389 : vector<1x256xf32> to vector<4x256xf32>
    %392 = arith.mulf %390, %391 : vector<4x256xf32>
    %393 = arith.addf %387, %392 : vector<4x256xf32>
    %c0_113 = arith.constant 0 : index
    %c19_114 = arith.constant 19 : index
    %394 = vector.load %arg5[%c0_113, %c19_114] : memref<4x36xf32, #tpu.memory_space<vmem>>, vector<4x1xf32>
    %395 = vector.extract_strided_slice %375 {offsets = [3, 0], sizes = [1, 256], strides = [1, 1]} : vector<4x256xf32> to vector<1x256xf32>
    %396 = vector.broadcast %394 : vector<4x1xf32> to vector<4x256xf32>
    %397 = vector.broadcast %395 : vector<1x256xf32> to vector<4x256xf32>
    %398 = arith.mulf %396, %397 : vector<4x256xf32>
    %399 = arith.addf %393, %398 : vector<4x256xf32>
    %c255_i32_115 = arith.constant 255 : i32
    %400 = tpu.dynamic_rotate %257 by %c255_i32_115 dim 1 : vector<4x256xf32>, i32 -> vector<4x256xf32>
    %c5_116 = arith.constant 5 : index
    %c0_117 = arith.constant 0 : index
    %401 = vector.load %arg2[%c5_116, %c0_117] : memref<9x256xf32, #tpu.memory_space<vmem>>, vector<1x256xf32>
    %402 = vector.broadcast %401 : vector<1x256xf32> to vector<4x256xf32>
    %403 = arith.mulf %400, %402 : vector<4x256xf32>
    %c0_118 = arith.constant 0 : index
    %c20_119 = arith.constant 20 : index
    %404 = vector.load %arg5[%c0_118, %c20_119] : memref<4x36xf32, #tpu.memory_space<vmem>>, vector<4x1xf32>
    %405 = vector.extract_strided_slice %403 {offsets = [0, 0], sizes = [1, 256], strides = [1, 1]} : vector<4x256xf32> to vector<1x256xf32>
    %406 = vector.broadcast %404 : vector<4x1xf32> to vector<4x256xf32>
    %407 = vector.broadcast %405 : vector<1x256xf32> to vector<4x256xf32>
    %408 = arith.mulf %406, %407 : vector<4x256xf32>
    %409 = arith.addf %399, %408 : vector<4x256xf32>
    %c0_120 = arith.constant 0 : index
    %c21_121 = arith.constant 21 : index
    %410 = vector.load %arg5[%c0_120, %c21_121] : memref<4x36xf32, #tpu.memory_space<vmem>>, vector<4x1xf32>
    %411 = vector.extract_strided_slice %403 {offsets = [1, 0], sizes = [1, 256], strides = [1, 1]} : vector<4x256xf32> to vector<1x256xf32>
    %412 = vector.broadcast %410 : vector<4x1xf32> to vector<4x256xf32>
    %413 = vector.broadcast %411 : vector<1x256xf32> to vector<4x256xf32>
    %414 = arith.mulf %412, %413 : vector<4x256xf32>
    %415 = arith.addf %409, %414 : vector<4x256xf32>
    %c0_122 = arith.constant 0 : index
    %c22_123 = arith.constant 22 : index
    %416 = vector.load %arg5[%c0_122, %c22_123] : memref<4x36xf32, #tpu.memory_space<vmem>>, vector<4x1xf32>
    %417 = vector.extract_strided_slice %403 {offsets = [2, 0], sizes = [1, 256], strides = [1, 1]} : vector<4x256xf32> to vector<1x256xf32>
    %418 = vector.broadcast %416 : vector<4x1xf32> to vector<4x256xf32>
    %419 = vector.broadcast %417 : vector<1x256xf32> to vector<4x256xf32>
    %420 = arith.mulf %418, %419 : vector<4x256xf32>
    %421 = arith.addf %415, %420 : vector<4x256xf32>
    %c0_124 = arith.constant 0 : index
    %c23_125 = arith.constant 23 : index
    %422 = vector.load %arg5[%c0_124, %c23_125] : memref<4x36xf32, #tpu.memory_space<vmem>>, vector<4x1xf32>
    %423 = vector.extract_strided_slice %403 {offsets = [3, 0], sizes = [1, 256], strides = [1, 1]} : vector<4x256xf32> to vector<1x256xf32>
    %424 = vector.broadcast %422 : vector<4x1xf32> to vector<4x256xf32>
    %425 = vector.broadcast %423 : vector<1x256xf32> to vector<4x256xf32>
    %426 = arith.mulf %424, %425 : vector<4x256xf32>
    %427 = arith.addf %421, %426 : vector<4x256xf32>
    %c241_i32_126 = arith.constant 241 : i32
    %428 = tpu.dynamic_rotate %257 by %c241_i32_126 dim 1 : vector<4x256xf32>, i32 -> vector<4x256xf32>
    %c6_127 = arith.constant 6 : index
    %c0_128 = arith.constant 0 : index
    %429 = vector.load %arg2[%c6_127, %c0_128] : memref<9x256xf32, #tpu.memory_space<vmem>>, vector<1x256xf32>
    %430 = vector.broadcast %429 : vector<1x256xf32> to vector<4x256xf32>
    %431 = arith.mulf %428, %430 : vector<4x256xf32>
    %c0_129 = arith.constant 0 : index
    %c24_130 = arith.constant 24 : index
    %432 = vector.load %arg5[%c0_129, %c24_130] : memref<4x36xf32, #tpu.memory_space<vmem>>, vector<4x1xf32>
    %433 = vector.extract_strided_slice %431 {offsets = [0, 0], sizes = [1, 256], strides = [1, 1]} : vector<4x256xf32> to vector<1x256xf32>
    %434 = vector.broadcast %432 : vector<4x1xf32> to vector<4x256xf32>
    %435 = vector.broadcast %433 : vector<1x256xf32> to vector<4x256xf32>
    %436 = arith.mulf %434, %435 : vector<4x256xf32>
    %437 = arith.addf %427, %436 : vector<4x256xf32>
    %c0_131 = arith.constant 0 : index
    %c25_132 = arith.constant 25 : index
    %438 = vector.load %arg5[%c0_131, %c25_132] : memref<4x36xf32, #tpu.memory_space<vmem>>, vector<4x1xf32>
    %439 = vector.extract_strided_slice %431 {offsets = [1, 0], sizes = [1, 256], strides = [1, 1]} : vector<4x256xf32> to vector<1x256xf32>
    %440 = vector.broadcast %438 : vector<4x1xf32> to vector<4x256xf32>
    %441 = vector.broadcast %439 : vector<1x256xf32> to vector<4x256xf32>
    %442 = arith.mulf %440, %441 : vector<4x256xf32>
    %443 = arith.addf %437, %442 : vector<4x256xf32>
    %c0_133 = arith.constant 0 : index
    %c26_134 = arith.constant 26 : index
    %444 = vector.load %arg5[%c0_133, %c26_134] : memref<4x36xf32, #tpu.memory_space<vmem>>, vector<4x1xf32>
    %445 = vector.extract_strided_slice %431 {offsets = [2, 0], sizes = [1, 256], strides = [1, 1]} : vector<4x256xf32> to vector<1x256xf32>
    %446 = vector.broadcast %444 : vector<4x1xf32> to vector<4x256xf32>
    %447 = vector.broadcast %445 : vector<1x256xf32> to vector<4x256xf32>
    %448 = arith.mulf %446, %447 : vector<4x256xf32>
    %449 = arith.addf %443, %448 : vector<4x256xf32>
    %c0_135 = arith.constant 0 : index
    %c27_136 = arith.constant 27 : index
    %450 = vector.load %arg5[%c0_135, %c27_136] : memref<4x36xf32, #tpu.memory_space<vmem>>, vector<4x1xf32>
    %451 = vector.extract_strided_slice %431 {offsets = [3, 0], sizes = [1, 256], strides = [1, 1]} : vector<4x256xf32> to vector<1x256xf32>
    %452 = vector.broadcast %450 : vector<4x1xf32> to vector<4x256xf32>
    %453 = vector.broadcast %451 : vector<1x256xf32> to vector<4x256xf32>
    %454 = arith.mulf %452, %453 : vector<4x256xf32>
    %455 = arith.addf %449, %454 : vector<4x256xf32>
    %c240_i32_137 = arith.constant 240 : i32
    %456 = tpu.dynamic_rotate %257 by %c240_i32_137 dim 1 : vector<4x256xf32>, i32 -> vector<4x256xf32>
    %c7_138 = arith.constant 7 : index
    %c0_139 = arith.constant 0 : index
    %457 = vector.load %arg2[%c7_138, %c0_139] : memref<9x256xf32, #tpu.memory_space<vmem>>, vector<1x256xf32>
    %458 = vector.broadcast %457 : vector<1x256xf32> to vector<4x256xf32>
    %459 = arith.mulf %456, %458 : vector<4x256xf32>
    %c0_140 = arith.constant 0 : index
    %c28_141 = arith.constant 28 : index
    %460 = vector.load %arg5[%c0_140, %c28_141] : memref<4x36xf32, #tpu.memory_space<vmem>>, vector<4x1xf32>
    %461 = vector.extract_strided_slice %459 {offsets = [0, 0], sizes = [1, 256], strides = [1, 1]} : vector<4x256xf32> to vector<1x256xf32>
    %462 = vector.broadcast %460 : vector<4x1xf32> to vector<4x256xf32>
    %463 = vector.broadcast %461 : vector<1x256xf32> to vector<4x256xf32>
    %464 = arith.mulf %462, %463 : vector<4x256xf32>
    %465 = arith.addf %455, %464 : vector<4x256xf32>
    %c0_142 = arith.constant 0 : index
    %c29_143 = arith.constant 29 : index
    %466 = vector.load %arg5[%c0_142, %c29_143] : memref<4x36xf32, #tpu.memory_space<vmem>>, vector<4x1xf32>
    %467 = vector.extract_strided_slice %459 {offsets = [1, 0], sizes = [1, 256], strides = [1, 1]} : vector<4x256xf32> to vector<1x256xf32>
    %468 = vector.broadcast %466 : vector<4x1xf32> to vector<4x256xf32>
    %469 = vector.broadcast %467 : vector<1x256xf32> to vector<4x256xf32>
    %470 = arith.mulf %468, %469 : vector<4x256xf32>
    %471 = arith.addf %465, %470 : vector<4x256xf32>
    %c0_144 = arith.constant 0 : index
    %c30_145 = arith.constant 30 : index
    %472 = vector.load %arg5[%c0_144, %c30_145] : memref<4x36xf32, #tpu.memory_space<vmem>>, vector<4x1xf32>
    %473 = vector.extract_strided_slice %459 {offsets = [2, 0], sizes = [1, 256], strides = [1, 1]} : vector<4x256xf32> to vector<1x256xf32>
    %474 = vector.broadcast %472 : vector<4x1xf32> to vector<4x256xf32>
    %475 = vector.broadcast %473 : vector<1x256xf32> to vector<4x256xf32>
    %476 = arith.mulf %474, %475 : vector<4x256xf32>
    %477 = arith.addf %471, %476 : vector<4x256xf32>
    %c0_146 = arith.constant 0 : index
    %c31_147 = arith.constant 31 : index
    %478 = vector.load %arg5[%c0_146, %c31_147] : memref<4x36xf32, #tpu.memory_space<vmem>>, vector<4x1xf32>
    %479 = vector.extract_strided_slice %459 {offsets = [3, 0], sizes = [1, 256], strides = [1, 1]} : vector<4x256xf32> to vector<1x256xf32>
    %480 = vector.broadcast %478 : vector<4x1xf32> to vector<4x256xf32>
    %481 = vector.broadcast %479 : vector<1x256xf32> to vector<4x256xf32>
    %482 = arith.mulf %480, %481 : vector<4x256xf32>
    %483 = arith.addf %477, %482 : vector<4x256xf32>
    %c239_i32_148 = arith.constant 239 : i32
    %484 = tpu.dynamic_rotate %257 by %c239_i32_148 dim 1 : vector<4x256xf32>, i32 -> vector<4x256xf32>
    %c8_149 = arith.constant 8 : index
    %c0_150 = arith.constant 0 : index
    %485 = vector.load %arg2[%c8_149, %c0_150] : memref<9x256xf32, #tpu.memory_space<vmem>>, vector<1x256xf32>
    %486 = vector.broadcast %485 : vector<1x256xf32> to vector<4x256xf32>
    %487 = arith.mulf %484, %486 : vector<4x256xf32>
    %c0_151 = arith.constant 0 : index
    %c32_152 = arith.constant 32 : index
    %488 = vector.load %arg5[%c0_151, %c32_152] : memref<4x36xf32, #tpu.memory_space<vmem>>, vector<4x1xf32>
    %489 = vector.extract_strided_slice %487 {offsets = [0, 0], sizes = [1, 256], strides = [1, 1]} : vector<4x256xf32> to vector<1x256xf32>
    %490 = vector.broadcast %488 : vector<4x1xf32> to vector<4x256xf32>
    %491 = vector.broadcast %489 : vector<1x256xf32> to vector<4x256xf32>
    %492 = arith.mulf %490, %491 : vector<4x256xf32>
    %493 = arith.addf %483, %492 : vector<4x256xf32>
    %c0_153 = arith.constant 0 : index
    %c33_154 = arith.constant 33 : index
    %494 = vector.load %arg5[%c0_153, %c33_154] : memref<4x36xf32, #tpu.memory_space<vmem>>, vector<4x1xf32>
    %495 = vector.extract_strided_slice %487 {offsets = [1, 0], sizes = [1, 256], strides = [1, 1]} : vector<4x256xf32> to vector<1x256xf32>
    %496 = vector.broadcast %494 : vector<4x1xf32> to vector<4x256xf32>
    %497 = vector.broadcast %495 : vector<1x256xf32> to vector<4x256xf32>
    %498 = arith.mulf %496, %497 : vector<4x256xf32>
    %499 = arith.addf %493, %498 : vector<4x256xf32>
    %c0_155 = arith.constant 0 : index
    %c34_156 = arith.constant 34 : index
    %500 = vector.load %arg5[%c0_155, %c34_156] : memref<4x36xf32, #tpu.memory_space<vmem>>, vector<4x1xf32>
    %501 = vector.extract_strided_slice %487 {offsets = [2, 0], sizes = [1, 256], strides = [1, 1]} : vector<4x256xf32> to vector<1x256xf32>
    %502 = vector.broadcast %500 : vector<4x1xf32> to vector<4x256xf32>
    %503 = vector.broadcast %501 : vector<1x256xf32> to vector<4x256xf32>
    %504 = arith.mulf %502, %503 : vector<4x256xf32>
    %505 = arith.addf %499, %504 : vector<4x256xf32>
    %c0_157 = arith.constant 0 : index
    %c35_158 = arith.constant 35 : index
    %506 = vector.load %arg5[%c0_157, %c35_158] : memref<4x36xf32, #tpu.memory_space<vmem>>, vector<4x1xf32>
    %507 = vector.extract_strided_slice %487 {offsets = [3, 0], sizes = [1, 256], strides = [1, 1]} : vector<4x256xf32> to vector<1x256xf32>
    %508 = vector.broadcast %506 : vector<4x1xf32> to vector<4x256xf32>
    %509 = vector.broadcast %507 : vector<1x256xf32> to vector<4x256xf32>
    %510 = arith.mulf %508, %509 : vector<4x256xf32>
    %511 = arith.addf %505, %510 : vector<4x256xf32>
    %cst_159 = arith.constant 0.000000e+00 : f32
    %512 = vector.broadcast %cst_159 : f32 to vector<4x256xf32>
    %513 = arith.maximumf %511, %512 : vector<4x256xf32>
    %c0_160 = arith.constant 0 : index
    %c0_161 = arith.constant 0 : index
    %c0_162 = arith.constant 0 : index
    %514 = vector.load %arg7[%c0_160, %c0_161, %c0_162] : memref<1x4x256xf32, #tpu.memory_space<vmem>>, vector<1x4x256xf32>
    %515 = vector.shape_cast %514 : vector<1x4x256xf32> to vector<4x256xf32>
    %516 = vector.shape_cast %513 : vector<4x256xf32> to vector<1x4x256xf32>
    tpu.vector_store %arg7[%c0_160, %c0_161, %c0_162], %516 {strides = array<i32>} : memref<1x4x256xf32, #tpu.memory_space<vmem>>, vector<1x4x256xf32>,
    return
  }
  func.func @transform_0(%arg0: i32) -> (i32, i32, i32) {
    %c0_i32 = arith.constant 0 : i32
    %c0_i32_0 = arith.constant 0 : i32
    %c0_i32_1 = arith.constant 0 : i32
    return %arg0, %c0_i32, %c0_i32_0 : i32, i32, i32
  }
  func.func @transform_1(%arg0: i32) -> (i32, i32) {
    %c0_i32 = arith.constant 0 : i32
    %c0_i32_0 = arith.constant 0 : i32
    %c0_i32_1 = arith.constant 0 : i32
    return %c0_i32, %c0_i32_0 : i32, i32
  }
  func.func @transform_2(%arg0: i32) -> (i32, i32) {
    %c0_i32 = arith.constant 0 : i32
    %c0_i32_0 = arith.constant 0 : i32
    %c0_i32_1 = arith.constant 0 : i32
    return %c0_i32, %c0_i32_0 : i32, i32
  }
  func.func @transform_3(%arg0: i32) -> (i32, i32) {
    %c0_i32 = arith.constant 0 : i32
    %c0_i32_0 = arith.constant 0 : i32
    %c0_i32_1 = arith.constant 0 : i32
    return %c0_i32, %c0_i32_0 : i32, i32
  }
  func.func @transform_4(%arg0: i32) -> (i32, i32) {
    %c0_i32 = arith.constant 0 : i32
    %c0_i32_0 = arith.constant 0 : i32
    %c0_i32_1 = arith.constant 0 : i32
    return %c0_i32, %c0_i32_0 : i32, i32
  }
  func.func @transform_5(%arg0: i32) -> (i32, i32) {
    %c0_i32 = arith.constant 0 : i32
    %c0_i32_0 = arith.constant 0 : i32
    %c0_i32_1 = arith.constant 0 : i32
    return %c0_i32, %c0_i32_0 : i32, i32
  }
  func.func @transform_6(%arg0: i32) -> (i32, i32, i32) {
    %c0_i32 = arith.constant 0 : i32
    %c0_i32_0 = arith.constant 0 : i32
    %c0_i32_1 = arith.constant 0 : i32
    return %arg0, %c0_i32, %c0_i32_0 : i32, i32, i32
  }
}

</mosaic_0001>

<llo_original>
// kernel: tpu_custom_call.1
$region0: #{tpu_custom_call.1}
  #allocation0 [shape = 'u32[]', space=smem, size = 0x4, offset = 0x4, fixed_abs, tag = 'smem constant byte address 0x4 - core index']
  #allocation1 [shape = 'u32[72,128]{1,0:T(1,128)}', space=vmem, size = 0x9000, scoped, tag = 'internal scratch']
  %s0 = inlined_call_operand.hbm [shape: f32[2,4,256], index: 0, kind: input, shape index: {}]
  %s1 = inlined_call_operand.hbm [shape: f32[9,256], index: 1, kind: input, shape index: {}]
  %s2 = inlined_call_operand.vmem [shape: f32[4,36], index: 2, kind: input, shape index: {}]
  %s3 = inlined_call_operand.vmem [shape: f32[4,1], index: 3, kind: input, shape index: {}]
  %s4 = inlined_call_operand.vmem [shape: f32[4,36], index: 4, kind: input, shape index: {}]
  %s5 = inlined_call_operand.vmem [shape: f32[4,1], index: 5, kind: input, shape index: {}]
  %s6 = inlined_call_operand.hbm [shape: f32[2,4,256], index: 6, kind: output, shape index: {}]
  %s7 = sld [smem:[#allocation0]]
  $region65: #{tpu_custom_call.1} parent=0
    _
  %s9 = ssub.s32 1, %s7
  %s10 = scalar_select 0, %s9, %s7
  $region1: #{tpu_custom_call.1} parent=0
    #allocation2 [shape = 'u8[8192]{0}', space=vmem, size = 0x2000, scoped, tag = 'input window, operand 0']
    #allocation3 [shape = 's32[2]{0}', space=sflag, size = 0x8, scoped, tag = 'scoped memory for tpu_custom_call.1']
    #allocation4 [shape = 's32[2]{0}', space=sflag, size = 0x8, scoped, tag = 'scoped memory for tpu_custom_call.1']
    #allocation5 [shape = 'u8[16384]{0}', space=vmem, size = 0x4000, scoped, tag = 'input window, operand 1, single buffered']
    #allocation6 [shape = 's32[1]{0}', space=sflag, size = 0x4, scoped, tag = 'scoped memory for tpu_custom_call.1']
    #allocation7 [shape = 'u8[8192]{0}', space=vmem, size = 0x2000, scoped, tag = 'output window, operand 0']
    %11 = vsyncpa [#allocation3], 0
    %s12 = scalar_lea.sflag [#allocation3], 1
    %13 = vsyncpa %s12, 0
    %14 = vsyncpa [#allocation6], 0
    %15 = vsyncpa [#allocation4], 0
    %s16 = scalar_lea.sflag [#allocation4], 1
    %17 = vsyncpa %s16, 0
    loop: start=0, step=1, limit=4
    $region2: #{tpu_custom_call.1} parent=1 // loop_pre_header
      _
    $region3: #{tpu_custom_call.1} parent=1 // loop_header
      %s19 = sphi 0, %s23
      %p20 = scmp.ge.s32.totalorder %s19, 4
      %s29 = sphi 0, %s31
      %s32 = sphi 0, %s29
      %s33 = sphi 0, %s32
      %s49 = sphi 0, %s33
      %s53 = sphi 0, %s53
      %s55 = sphi 0, %s53
      %s56 = sphi 0, %s55
      %s70 = sphi 0, %s56
      %s74 = sphi 0, %s74
      %s76 = sphi 0, %s74
      %s77 = sphi 0, %s76
      %s91 = sphi 0, %s77
      %s95 = sphi 0, %s95
      %s97 = sphi 0, %s95
      %s98 = sphi 0, %s97
      %s112 = sphi 0, %s98
      %s116 = sphi 0, %s116
      %s118 = sphi 0, %s116
      %s119 = sphi 0, %s118
      %s133 = sphi 0, %s119
      %s137 = sphi 0, %s137
      %s139 = sphi 0, %s137
      %s140 = sphi 0, %s139
      %s154 = sphi 0, %s140
      %s160 = sphi 0, %s162
      %s163 = sphi 0, %s160
      %s164 = sphi 0, %s163
      %s180 = sphi 0, %s164
    $region4: #{tpu_custom_call.1} parent=1 // loop_header_branch
      %22 = sbr.rel (%p20) target = $region8
    $region5: #{tpu_custom_call.1} parent=1 // loop_body
      %s24 = ssub.s32 %s19, 1
      %s25 = ssub.s32 %s19, 2
      %s26 = sadd.s32 %s19, 1
      %s27 = ssub.s32 %s19, %s26
      %p28 = scmp.eq.s32.totalorder %s27, 0
      %s30 = sadd.s32 %s29, 1
      %s31 = scalar_select %p28, %s29, %s30
      %p34 = pneg %p28
      %p35 = scmp.eq.s32.totalorder %s19, 1
      %p36 = por %p34, %p35
      %p37 = scmp.ne.s32.totalorder %s29, %s32
      %p38 = scmp.eq.s32.totalorder %s19, 0
      %p39 = por %p37, %p38
      %p40 = scmp.ne.s32.totalorder %s29, %s32
      %p41 = scmp.eq.s32.totalorder %s24, 1
      %p42 = por %p40, %p41
      %p43 = scmp.ne.s32.totalorder %s32, %s33
      %p44 = scmp.eq.s32.totalorder %s24, 0
      %p45 = por %p43, %p44
      %p46 = scmp.ne.s32.totalorder %s32, %s33
      %p47 = scmp.eq.s32.totalorder %s25, 1
      %p48 = por %p46, %p47
      %p50 = scmp.ne.s32.totalorder %s33, %s49
      %p51 = scmp.eq.s32.totalorder %s25, 0
      %p52 = por %p50, %p51
      %s54 = sadd.s32 %s53, 1
      %p57 = scmp.eq.s32.totalorder %s19, 1
      %p58 = scmp.ne.s32.totalorder %s53, %s55
      %p59 = scmp.eq.s32.totalorder %s19, 0
      %p60 = por %p58, %p59
      %p61 = scmp.ne.s32.totalorder %s53, %s55
      %p62 = scmp.eq.s32.totalorder %s24, 1
      %p63 = por %p61, %p62
      %p64 = scmp.ne.s32.totalorder %s55, %s56
      %p65 = scmp.eq.s32.totalorder %s24, 0
      %p66 = por %p64, %p65
      %p67 = scmp.ne.s32.totalorder %s55, %s56
      %p68 = scmp.eq.s32.totalorder %s25, 1
      %p69 = por %p67, %p68
      %p71 = scmp.ne.s32.totalorder %s56, %s70
      %p72 = scmp.eq.s32.totalorder %s25, 0
      %p73 = por %p71, %p72
      %s75 = sadd.s32 %s74, 1
      %p78 = scmp.eq.s32.totalorder %s19, 1
      %p79 = scmp.ne.s32.totalorder %s74, %s76
      %p80 = scmp.eq.s32.totalorder %s19, 0
      %p81 = por %p79, %p80
      %p82 = scmp.ne.s32.totalorder %s74, %s76
      %p83 = scmp.eq.s32.totalorder %s24, 1
      %p84 = por %p82, %p83
      %p85 = scmp.ne.s32.totalorder %s76, %s77
      %p86 = scmp.eq.s32.totalorder %s24, 0
      %p87 = por %p85, %p86
      %p88 = scmp.ne.s32.totalorder %s76, %s77
      %p89 = scmp.eq.s32.totalorder %s25, 1
      %p90 = por %p88, %p89
      %p92 = scmp.ne.s32.totalorder %s77, %s91
      %p93 = scmp.eq.s32.totalorder %s25, 0
      %p94 = por %p92, %p93
      %s96 = sadd.s32 %s95, 1
      %p99 = scmp.eq.s32.totalorder %s19, 1
      %p100 = scmp.ne.s32.totalorder %s95, %s97
      %p101 = scmp.eq.s32.totalorder %s19, 0
      %p102 = por %p100, %p101
      %p103 = scmp.ne.s32.totalorder %s95, %s97
      %p104 = scmp.eq.s32.totalorder %s24, 1
      %p105 = por %p103, %p104
      %p106 = scmp.ne.s32.totalorder %s97, %s98
      %p107 = scmp.eq.s32.totalorder %s24, 0
      %p108 = por %p106, %p107
      %p109 = scmp.ne.s32.totalorder %s97, %s98
      %p110 = scmp.eq.s32.totalorder %s25, 1
      %p111 = por %p109, %p110
      %p113 = scmp.ne.s32.totalorder %s98, %s112
      %p114 = scmp.eq.s32.totalorder %s25, 0
      %p115 = por %p113, %p114
      %s117 = sadd.s32 %s116, 1
      %p120 = scmp.eq.s32.totalorder %s19, 1
      %p121 = scmp.ne.s32.totalorder %s116, %s118
      %p122 = scmp.eq.s32.totalorder %s19, 0
      %p123 = por %p121, %p122
      %p124 = scmp.ne.s32.totalorder %s116, %s118
      %p125 = scmp.eq.s32.totalorder %s24, 1
      %p126 = por %p124, %p125
      %p127 = scmp.ne.s32.totalorder %s118, %s119
      %p128 = scmp.eq.s32.totalorder %s24, 0
      %p129 = por %p127, %p128
      %p130 = scmp.ne.s32.totalorder %s118, %s119
      %p131 = scmp.eq.s32.totalorder %s25, 1
      %p132 = por %p130, %p131
      %p134 = scmp.ne.s32.totalorder %s119, %s133
      %p135 = scmp.eq.s32.totalorder %s25, 0
      %p136 = por %p134, %p135
      %s138 = sadd.s32 %s137, 1
      %p141 = scmp.eq.s32.totalorder %s19, 1
      %p142 = scmp.ne.s32.totalorder %s137, %s139
      %p143 = scmp.eq.s32.totalorder %s19, 0
      %p144 = por %p142, %p143
      %p145 = scmp.ne.s32.totalorder %s137, %s139
      %p146 = scmp.eq.s32.totalorder %s24, 1
      %p147 = por %p145, %p146
      %p148 = scmp.ne.s32.totalorder %s139, %s140
      %p149 = scmp.eq.s32.totalorder %s24, 0
      %p150 = por %p148, %p149
      %p151 = scmp.ne.s32.totalorder %s139, %s140
      %p152 = scmp.eq.s32.totalorder %s25, 1
      %p153 = por %p151, %p152
      %p155 = scmp.ne.s32.totalorder %s140, %s154
      %p156 = scmp.eq.s32.totalorder %s25, 0
      %p157 = por %p155, %p156
      %s158 = ssub.s32 %s19, %s26
      %p159 = scmp.eq.s32.totalorder %s158, 0
      %s161 = sadd.s32 %s160, 1
      %s162 = scalar_select %p159, %s160, %s161
      %p165 = pneg %p159
      %p166 = scmp.eq.s32.totalorder %s19, 1
      %p167 = por %p165, %p166
      %p168 = scmp.ne.s32.totalorder %s160, %s163
      %p169 = scmp.eq.s32.totalorder %s19, 0
      %p170 = por %p168, %p169
      %p171 = scmp.ne.s32.totalorder %s160, %s163
      %p172 = scmp.eq.s32.totalorder %s24, 1
      %p173 = por %p171, %p172
      %p174 = scmp.ne.s32.totalorder %s163, %s164
      %p175 = scmp.eq.s32.totalorder %s24, 0
      %p176 = por %p174, %p175
      %p177 = scmp.ne.s32.totalorder %s163, %s164
      %p178 = scmp.eq.s32.totalorder %s25, 1
      %p179 = por %p177, %p178
      %p181 = scmp.ne.s32.totalorder %s164, %s180
      %p182 = scmp.eq.s32.totalorder %s25, 0
      %p183 = por %p181, %p182
      %p184 = scmp.le.s32.totalorder 1, %s19
      %p185 = scmp.lt.s32.totalorder %s19, 3
      %p186 = pnand %p184, %p185
      %p187 = pneg %p186
      // Predicated region
      $region9: #{tpu_custom_call.1} parent=5 // pred_check
        _
      $region10: #{tpu_custom_call.1} parent=5 // pred_check_branch
        %189 = sbr.rel (%p186) target = $region12
      $region11: #{tpu_custom_call.1} parent=5 // pred_region
        %s190 = ssub.s32 %s19, 1
        // Predicated region
        $region13: #{tpu_custom_call.1} parent=11 // pred_check
          %p191 = pneg %p66
        $region14: #{tpu_custom_call.1} parent=11 // pred_check_branch
          %193 = sbr.rel (%p191) target = $region16
        $region15: #{tpu_custom_call.1} parent=11 // pred_region
          %195 = vsyncadd [#allocation6], 0
          %s196 = sshll.u32 %s1, 4
          %s197 = int_to_ptr.hbm [resolvable:$true] %s196
          %s198 = sshll.u32 [#allocation5], 4
          %s199 = int_to_ptr.vmem [resolvable:$true] %s198
          %204 = dma.hbm_to_vmem [thread:$0]  %s197, 512, %s199, [#allocation6], 256, 256, 16
        $region16: #{tpu_custom_call.1} parent=11 // pred_fallthru
          _
        // Predicated region
        $region17: #{tpu_custom_call.1} parent=11 // pred_check
          %p205 = pneg %p87
        $region18: #{tpu_custom_call.1} parent=11 // pred_check_branch
          %207 = sbr.rel (%p205) target = $region20
        $region19: #{tpu_custom_call.1} parent=11 // pred_region
          _
        $region20: #{tpu_custom_call.1} parent=11 // pred_fallthru
          _
        // Predicated region
        $region21: #{tpu_custom_call.1} parent=11 // pred_check
          %p208 = pneg %p108
        $region22: #{tpu_custom_call.1} parent=11 // pred_check_branch
          %210 = sbr.rel (%p208) target = $region24
        $region23: #{tpu_custom_call.1} parent=11 // pred_region
          _
        $region24: #{tpu_custom_call.1} parent=11 // pred_fallthru
          _
        // Predicated region
        $region25: #{tpu_custom_call.1} parent=11 // pred_check
          %p211 = pneg %p129
        $region26: #{tpu_custom_call.1} parent=11 // pred_check_branch
          %213 = sbr.rel (%p211) target = $region28
        $region27: #{tpu_custom_call.1} parent=11 // pred_region
          _
        $region28: #{tpu_custom_call.1} parent=11 // pred_fallthru
          _
        // Predicated region
        $region29: #{tpu_custom_call.1} parent=11 // pred_check
          %p214 = pneg %p150
        $region30: #{tpu_custom_call.1} parent=11 // pred_check_branch
          %216 = sbr.rel (%p214) target = $region32
        $region31: #{tpu_custom_call.1} parent=11 // pred_region
          _
        $region32: #{tpu_custom_call.1} parent=11 // pred_fallthru
          _
      $region12: #{tpu_custom_call.1} parent=5 // pred_fallthru
        _
      %p217 = scmp.lt.s32.totalorder %s19, 2
      // Predicated region
      $region33: #{tpu_custom_call.1} parent=5 // pred_check
        %p218 = pneg %p217
      $region34: #{tpu_custom_call.1} parent=5 // pred_check_branch
        %220 = sbr.rel (%p218) target = $region36
      $region35: #{tpu_custom_call.1} parent=5 // pred_region
        // Predicated region
        $region37: #{tpu_custom_call.1} parent=35 // pred_check
          %p221 = pneg %p39
        $region38: #{tpu_custom_call.1} parent=35 // pred_check_branch
          %223 = sbr.rel (%p221) target = $region40
        $region39: #{tpu_custom_call.1} parent=35 // pred_region
          %s224 = sand.u32 %s29, 1
          %s225 = scalar_lea.sflag [#allocation3], %s224
          %s226 = sand.u32 %s29, 1
          %s227 = smul.addr %s226, 8
          %s228 = scalar_lea.vmem [#allocation2], %s227
          %230 = vsyncadd %s225, 0
          %s231 = smul.addr %s19, 2
          %s232 = smul.addr %s231, 4
          %s233 = scalar_lea.hbm %s0, %s232
          %s235 = sshll.u32 %s233, 4
          %s236 = int_to_ptr.hbm [resolvable:$true] %s235
          %s237 = sshll.u32 %s228, 4
          %s238 = int_to_ptr.vmem [resolvable:$true] %s237
          %240 = dma.hbm_to_vmem [thread:$0]  %s236, 128, %s238, %s225
        $region40: #{tpu_custom_call.1} parent=35 // pred_fallthru
          _
      $region36: #{tpu_custom_call.1} parent=5 // pred_fallthru
        _
      %p241 = scmp.le.s32.totalorder 1, %s19
      %p242 = scmp.lt.s32.totalorder %s19, 3
      %p243 = pnand %p241, %p242
      %p244 = pneg %p243
      // Predicated region
      $region41: #{tpu_custom_call.1} parent=5 // pred_check
        _
      $region42: #{tpu_custom_call.1} parent=5 // pred_check_branch
        %246 = sbr.rel (%p243) target = $region44
      $region43: #{tpu_custom_call.1} parent=5 // pred_region
        %s247 = ssub.s32 %s19, 1
        %s248 = sand.u32 %s32, 1
        %s249 = scalar_lea.sflag [#allocation3], %s248
        %s250 = sand.u32 %s32, 1
        %s251 = smul.addr %s250, 8
        %s252 = scalar_lea.vmem [#allocation2], %s251
        // Predicated region
        $region45: #{tpu_custom_call.1} parent=43 // pred_check
          %p253 = pneg %p45
        $region46: #{tpu_custom_call.1} parent=43 // pred_check_branch
          %255 = sbr.rel (%p253) target = $region48
        $region47: #{tpu_custom_call.1} parent=43 // pred_region
          %257 = dma.done %s249, 128
        $region48: #{tpu_custom_call.1} parent=43 // pred_fallthru
          _
        // Predicated region
        $region49: #{tpu_custom_call.1} parent=43 // pred_check
          %p258 = pneg %p66
        $region50: #{tpu_custom_call.1} parent=43 // pred_check_branch
          %260 = sbr.rel (%p258) target = $region52
        $region51: #{tpu_custom_call.1} parent=43 // pred_region
          %262 = dma.done [#allocation6], 512
        $region52: #{tpu_custom_call.1} parent=43 // pred_fallthru
          _
        %s263 = sand.u32 %s32, 1
        %s264 = scalar_lea.sflag [#allocation3], %s263
        %s265 = sand.u32 %s32, 1
        %s266 = smul.addr %s265, 8
        %s267 = scalar_lea.vmem [#allocation2], %s266
        %p268 = pneg %p45
        %p269 = pneg %p42
        %p270 = pneg %p66
        %p271 = pneg %p63
        %p272 = pneg %p87
        %p273 = pneg %p84
        %p274 = pneg %p108
        %p275 = pneg %p105
        %p276 = pneg %p129
        %p277 = pneg %p126
        %p278 = pneg %p150
        %p279 = pneg %p147
        %p280 = pneg %p176
        %p281 = pneg %p173
        %s282 = sand.u32 %s163, 1
        %s283 = scalar_lea.sflag [#allocation4], %s282
        %s284 = sand.u32 %s163, 1
        %s285 = smul.addr %s284, 8
        %s286 = scalar_lea.vmem [#allocation7], %s285
        %v287 = vld [vmem:[%s252] sm:$0xff]
        %v288 = vld [vmem:[%s3] sm:$0xf]
        %290 = vset.pattern.permute.xlu0 0
        %291 = vperm.xlu0 %290, %v288
        %v292 = vpop.permute.xlu0 %291
        %295 = vst [vmem:[#allocation1] ss:$2 sm:$0xff] %v287
        %v296 = vld.sshfl [vmem:[#allocation1] sm:$0xff pattern:$0x75316420]
        %v297 = vld.sshfl [vmem:[#allocation1 + $0x8] sm:$0xff pattern:$0x75316420]
        %300 = vrot.lane.b32.xlu0 %v296, 17
        %v301 = vpop.permute.xlu0 %300
        %302 = vrot.lane.b32.xlu0 %v297, 17
        %v303 = vpop.permute.xlu0 %302
        %v304 = vlaneseq
        %v305 = vand.u32 %v304, 127
        %vm306 = vcmp.lt.s32.totalorder %v305, 17
        %v307 = vsel %vm306, %v301, %v303
        %v308 = vsel %vm306, %v303, %v301
        %v309 = vld [vmem:[#allocation5] ss:$8 sm:$0x3]
        %v311 = vperm.slane %v309, 0
        %v312 = vperm.slane %v309, 1
        %v315 = vmul.f32 %v308, %v311
        %v316 = vmul.f32 %v307, %v312
        %v317 = vld [vmem:[%s2] sm:$0xf]
        %319 = vset.pattern.permute.xlu0 0
        %320 = vperm.xlu0 %319, %v317
        %v321 = vpop.permute.xlu0 %320
        %v323 = vperm.slane %v315, 0
        %v324 = vperm.slane %v316, 0
        %v325 = vmul.f32 %v321, %v323
        %v326 = vmul.f32 %v321, %v324
        %v327 = vadd.f32 %v292, %v325
        %v328 = vadd.f32 %v292, %v326
        %329 = vset.pattern.permute.xlu0 1
        %330 = vperm.xlu0 %329, %v317
        %v331 = vpop.permute.xlu0 %330
        %v333 = vperm.slane %v315, 1
        %v334 = vperm.slane %v316, 1
        %v335 = vmul.f32 %v331, %v333
        %v336 = vmul.f32 %v331, %v334
        %v337 = vadd.f32 %v327, %v335
        %v338 = vadd.f32 %v328, %v336
        %339 = vset.pattern.permute.xlu0 2
        %340 = vperm.xlu0 %339, %v317
        %v341 = vpop.permute.xlu0 %340
        %v343 = vperm.slane %v315, 2
        %v344 = vperm.slane %v316, 2
        %v345 = vmul.f32 %v341, %v343
        %v346 = vmul.f32 %v341, %v344
        %v347 = vadd.f32 %v337, %v345
        %v348 = vadd.f32 %v338, %v346
        %349 = vset.pattern.permute.xlu0 3
        %350 = vperm.xlu0 %349, %v317
        %v351 = vpop.permute.xlu0 %350
        %v353 = vperm.slane %v315, 3
        %v354 = vperm.slane %v316, 3
        %v355 = vmul.f32 %v351, %v353
        %v356 = vmul.f32 %v351, %v354
        %v357 = vadd.f32 %v347, %v355
        %v358 = vadd.f32 %v348, %v356
        %359 = vst [vmem:[#allocation1] ss:$2 sm:$0xff] %v287
        %v360 = vld.sshfl [vmem:[#allocation1] sm:$0xff pattern:$0x75316420]
        %v361 = vld.sshfl [vmem:[#allocation1 + $0x8] sm:$0xff pattern:$0x75316420]
        %364 = vrot.lane.b32.xlu0 %v360, 16
        %v365 = vpop.permute.xlu0 %364
        %366 = vrot.lane.b32.xlu0 %v361, 16
        %v367 = vpop.permute.xlu0 %366
        %vm368 = vcmp.lt.s32.totalorder %v305, 16
        %v369 = vsel %vm368, %v365, %v367
        %v370 = vsel %vm368, %v367, %v365
        %s371 = scalar_lea.vmem [#allocation5], 1
        %v372 = vld [vmem:[%s371] ss:$8 sm:$0x3]
        %v374 = vperm.slane %v372, 0
        %v375 = vperm.slane %v372, 1
        %v378 = vmul.f32 %v370, %v374
        %v379 = vmul.f32 %v369, %v375
        %v380 = vld [vmem:[%s2] sm:$0xf]
        %382 = vset.pattern.permute.xlu0 4
        %383 = vperm.xlu0 %382, %v380
        %v384 = vpop.permute.xlu0 %383
        %v386 = vperm.slane %v378, 0
        %v387 = vperm.slane %v379, 0
        %v388 = vmul.f32 %v384, %v386
        %v389 = vmul.f32 %v384, %v387
        %v390 = vadd.f32 %v357, %v388
        %v391 = vadd.f32 %v358, %v389
        %392 = vset.pattern.permute.xlu0 5
        %393 = vperm.xlu0 %392, %v380
        %v394 = vpop.permute.xlu0 %393
        %v396 = vperm.slane %v378, 1
        %v397 = vperm.slane %v379, 1
        %v398 = vmul.f32 %v394, %v396
        %v399 = vmul.f32 %v394, %v397
        %v400 = vadd.f32 %v390, %v398
        %v401 = vadd.f32 %v391, %v399
        %402 = vset.pattern.permute.xlu0 6
        %403 = vperm.xlu0 %402, %v380
        %v404 = vpop.permute.xlu0 %403
        %v406 = vperm.slane %v378, 2
        %v407 = vperm.slane %v379, 2
        %v408 = vmul.f32 %v404, %v406
        %v409 = vmul.f32 %v404, %v407
        %v410 = vadd.f32 %v400, %v408
        %v411 = vadd.f32 %v401, %v409
        %412 = vset.pattern.permute.xlu0 7
        %413 = vperm.xlu0 %412, %v380
        %v414 = vpop.permute.xlu0 %413
        %v416 = vperm.slane %v378, 3
        %v417 = vperm.slane %v379, 3
        %v418 = vmul.f32 %v414, %v416
        %v419 = vmul.f32 %v414, %v417
        %v420 = vadd.f32 %v410, %v418
        %v421 = vadd.f32 %v411, %v419
        %422 = vst [vmem:[#allocation1] ss:$2 sm:$0xff] %v287
        %v423 = vld.sshfl [vmem:[#allocation1] sm:$0xff pattern:$0x75316420]
        %v424 = vld.sshfl [vmem:[#allocation1 + $0x8] sm:$0xff pattern:$0x75316420]
        %427 = vrot.lane.b32.xlu0 %v423, 15
        %v428 = vpop.permute.xlu0 %427
        %429 = vrot.lane.b32.xlu0 %v424, 15
        %v430 = vpop.permute.xlu0 %429
        %vm431 = vcmp.lt.s32.totalorder %v305, 15
        %v432 = vsel %vm431, %v428, %v430
        %v433 = vsel %vm431, %v430, %v428
        %s434 = scalar_lea.vmem [#allocation5], 2
        %v435 = vld [vmem:[%s434] ss:$8 sm:$0x3]
        %v437 = vperm.slane %v435, 0
        %v438 = vperm.slane %v435, 1
        %v441 = vmul.f32 %v433, %v437
        %v442 = vmul.f32 %v432, %v438
        %v443 = vld [vmem:[%s2] sm:$0xf]
        %445 = vset.pattern.permute.xlu0 8
        %446 = vperm.xlu0 %445, %v443
        %v447 = vpop.permute.xlu0 %446
        %v449 = vperm.slane %v441, 0
        %v450 = vperm.slane %v442, 0
        %v451 = vmul.f32 %v447, %v449
        %v452 = vmul.f32 %v447, %v450
        %v453 = vadd.f32 %v420, %v451
        %v454 = vadd.f32 %v421, %v452
        %455 = vset.pattern.permute.xlu0 9
        %456 = vperm.xlu0 %455, %v443
        %v457 = vpop.permute.xlu0 %456
        %v459 = vperm.slane %v441, 1
        %v460 = vperm.slane %v442, 1
        %v461 = vmul.f32 %v457, %v459
        %v462 = vmul.f32 %v457, %v460
        %v463 = vadd.f32 %v453, %v461
        %v464 = vadd.f32 %v454, %v462
        %465 = vset.pattern.permute.xlu0 10
        %466 = vperm.xlu0 %465, %v443
        %v467 = vpop.permute.xlu0 %466
        %v469 = vperm.slane %v441, 2
        %v470 = vperm.slane %v442, 2
        %v471 = vmul.f32 %v467, %v469
        %v472 = vmul.f32 %v467, %v470
        %v473 = vadd.f32 %v463, %v471
        %v474 = vadd.f32 %v464, %v472
        %475 = vset.pattern.permute.xlu0 11
        %476 = vperm.xlu0 %475, %v443
        %v477 = vpop.permute.xlu0 %476
        %v479 = vperm.slane %v441, 3
        %v480 = vperm.slane %v442, 3
        %v481 = vmul.f32 %v477, %v479
        %v482 = vmul.f32 %v477, %v480
        %v483 = vadd.f32 %v473, %v481
        %v484 = vadd.f32 %v474, %v482
        %485 = vst [vmem:[#allocation1] ss:$2 sm:$0xff] %v287
        %v486 = vld.sshfl [vmem:[#allocation1] sm:$0xff pattern:$0x75316420]
        %v487 = vld.sshfl [vmem:[#allocation1 + $0x8] sm:$0xff pattern:$0x75316420]
        %490 = vrot.lane.b32.xlu0 %v486, 1
        %v491 = vpop.permute.xlu0 %490
        %492 = vrot.lane.b32.xlu0 %v487, 1
        %v493 = vpop.permute.xlu0 %492
        %vm494 = vcmp.lt.s32.totalorder %v305, 1
        %v495 = vsel %vm494, %v491, %v493
        %v496 = vsel %vm494, %v493, %v491
        %s497 = scalar_lea.vmem [#allocation5], 3
        %v498 = vld [vmem:[%s497] ss:$8 sm:$0x3]
        %v500 = vperm.slane %v498, 0
        %v501 = vperm.slane %v498, 1
        %v504 = vmul.f32 %v496, %v500
        %v505 = vmul.f32 %v495, %v501
        %v506 = vld [vmem:[%s2] sm:$0xf]
        %508 = vset.pattern.permute.xlu0 12
        %509 = vperm.xlu0 %508, %v506
        %v510 = vpop.permute.xlu0 %509
        %v512 = vperm.slane %v504, 0
        %v513 = vperm.slane %v505, 0
        %v514 = vmul.f32 %v510, %v512
        %v515 = vmul.f32 %v510, %v513
        %v516 = vadd.f32 %v483, %v514
        %v517 = vadd.f32 %v484, %v515
        %518 = vset.pattern.permute.xlu0 13
        %519 = vperm.xlu0 %518, %v506
        %v520 = vpop.permute.xlu0 %519
        %v522 = vperm.slane %v504, 1
        %v523 = vperm.slane %v505, 1
        %v524 = vmul.f32 %v520, %v522
        %v525 = vmul.f32 %v520, %v523
        %v526 = vadd.f32 %v516, %v524
        %v527 = vadd.f32 %v517, %v525
        %528 = vset.pattern.permute.xlu0 14
        %529 = vperm.xlu0 %528, %v506
        %v530 = vpop.permute.xlu0 %529
        %v532 = vperm.slane %v504, 2
        %v533 = vperm.slane %v505, 2
        %v534 = vmul.f32 %v530, %v532
        %v535 = vmul.f32 %v530, %v533
        %v536 = vadd.f32 %v526, %v534
        %v537 = vadd.f32 %v527, %v535
        %538 = vset.pattern.permute.xlu0 15
        %539 = vperm.xlu0 %538, %v506
        %v540 = vpop.permute.xlu0 %539
        %v542 = vperm.slane %v504, 3
        %v543 = vperm.slane %v505, 3
        %v544 = vmul.f32 %v540, %v542
        %v545 = vmul.f32 %v540, %v543
        %v546 = vadd.f32 %v536, %v544
        %v547 = vadd.f32 %v537, %v545
        %s548 = scalar_lea.vmem [#allocation5], 4
        %v549 = vld [vmem:[%s548] ss:$8 sm:$0x3]
        %v551 = vperm.slane %v549, 0
        %v552 = vperm.slane %v549, 1
        %v555 = vrot.slane %v552, 4
        %vm556 = vcmask 1043456
        %v557 = vsel %vm556, %v551, %v555
        %v559 = vmul.f32 %v287, %v557
        %560 = vset.pattern.permute.xlu0 16
        %561 = vperm.xlu0 %560, %v506
        %v562 = vpop.permute.xlu0 %561
        %v565 = vperm.slane %v559, 0
        %v566 = vperm.slane %v559, 4
        %v569 = vperm.slane %v565, 0
        %v570 = vperm.slane %v566, 0
        %v571 = vmul.f32 %v562, %v569
        %v572 = vmul.f32 %v562, %v570
        %v573 = vadd.f32 %v546, %v571
        %v574 = vadd.f32 %v547, %v572
        %575 = vset.pattern.permute.xlu0 17
        %576 = vperm.xlu0 %575, %v506
        %v577 = vpop.permute.xlu0 %576
        %v579 = vperm.slane %v559, 1
        %v580 = vperm.slane %v559, 5
        %v583 = vperm.slane %v579, 1
        %v584 = vperm.slane %v580, 1
        %v585 = vmul.f32 %v577, %v583
        %v586 = vmul.f32 %v577, %v584
        %v587 = vadd.f32 %v573, %v585
        %v588 = vadd.f32 %v574, %v586
        %589 = vset.pattern.permute.xlu0 18
        %590 = vperm.xlu0 %589, %v506
        %v591 = vpop.permute.xlu0 %590
        %v593 = vperm.slane %v559, 2
        %v594 = vperm.slane %v559, 6
        %v597 = vperm.slane %v593, 2
        %v598 = vperm.slane %v594, 2
        %v599 = vmul.f32 %v591, %v597
        %v600 = vmul.f32 %v591, %v598
        %v601 = vadd.f32 %v587, %v599
        %v602 = vadd.f32 %v588, %v600
        %603 = vset.pattern.permute.xlu0 19
        %604 = vperm.xlu0 %603, %v506
        %v605 = vpop.permute.xlu0 %604
        %v607 = vperm.slane %v559, 3
        %v608 = vperm.slane %v559, 7
        %v611 = vperm.slane %v607, 3
        %v612 = vperm.slane %v608, 3
        %v613 = vmul.f32 %v605, %v611
        %v614 = vmul.f32 %v605, %v612
        %v615 = vadd.f32 %v601, %v613
        %v616 = vadd.f32 %v602, %v614
        %617 = vst [vmem:[#allocation1] ss:$2 sm:$0xff] %v287
        %v618 = vld.sshfl [vmem:[#allocation1] sm:$0xff pattern:$0x75316420]
        %v619 = vld.sshfl [vmem:[#allocation1 + $0x8] sm:$0xff pattern:$0x75316420]
        %622 = vrot.lane.b32.xlu0 %v618, 127
        %v623 = vpop.permute.xlu0 %622
        %624 = vrot.lane.b32.xlu0 %v619, 127
        %v625 = vpop.permute.xlu0 %624
        %vm626 = vcmp.lt.s32.totalorder %v305, 127
        %v627 = vsel %vm626, %v623, %v625
        %v628 = vsel %vm626, %v625, %v623
        %s629 = scalar_lea.vmem [#allocation5], 5
        %v630 = vld [vmem:[%s629] ss:$8 sm:$0x3]
        %v632 = vperm.slane %v630, 0
        %v633 = vperm.slane %v630, 1
        %v636 = vmul.f32 %v627, %v632
        %v637 = vmul.f32 %v628, %v633
        %v638 = vld [vmem:[%s2] sm:$0xf]
        %640 = vset.pattern.permute.xlu0 20
        %641 = vperm.xlu0 %640, %v638
        %v642 = vpop.permute.xlu0 %641
        %v644 = vperm.slane %v636, 0
        %v645 = vperm.slane %v637, 0
        %v646 = vmul.f32 %v642, %v644
        %v647 = vmul.f32 %v642, %v645
        %v648 = vadd.f32 %v615, %v646
        %v649 = vadd.f32 %v616, %v647
        %650 = vset.pattern.permute.xlu0 21
        %651 = vperm.xlu0 %650, %v638
        %v652 = vpop.permute.xlu0 %651
        %v654 = vperm.slane %v636, 1
        %v655 = vperm.slane %v637, 1
        %v656 = vmul.f32 %v652, %v654
        %v657 = vmul.f32 %v652, %v655
        %v658 = vadd.f32 %v648, %v656
        %v659 = vadd.f32 %v649, %v657
        %660 = vset.pattern.permute.xlu0 22
        %661 = vperm.xlu0 %660, %v638
        %v662 = vpop.permute.xlu0 %661
        %v664 = vperm.slane %v636, 2
        %v665 = vperm.slane %v637, 2
        %v666 = vmul.f32 %v662, %v664
        %v667 = vmul.f32 %v662, %v665
        %v668 = vadd.f32 %v658, %v666
        %v669 = vadd.f32 %v659, %v667
        %670 = vset.pattern.permute.xlu0 23
        %671 = vperm.xlu0 %670, %v638
        %v672 = vpop.permute.xlu0 %671
        %v674 = vperm.slane %v636, 3
        %v675 = vperm.slane %v637, 3
        %v676 = vmul.f32 %v672, %v674
        %v677 = vmul.f32 %v672, %v675
        %v678 = vadd.f32 %v668, %v676
        %v679 = vadd.f32 %v669, %v677
        %680 = vst [vmem:[#allocation1] ss:$2 sm:$0xff] %v287
        %v681 = vld.sshfl [vmem:[#allocation1] sm:$0xff pattern:$0x75316420]
        %v682 = vld.sshfl [vmem:[#allocation1 + $0x8] sm:$0xff pattern:$0x75316420]
        %685 = vrot.lane.b32.xlu0 %v681, 113
        %v686 = vpop.permute.xlu0 %685
        %687 = vrot.lane.b32.xlu0 %v682, 113
        %v688 = vpop.permute.xlu0 %687
        %vm689 = vcmp.lt.s32.totalorder %v305, 113
        %v690 = vsel %vm689, %v686, %v688
        %v691 = vsel %vm689, %v688, %v686
        %s692 = scalar_lea.vmem [#allocation5], 6
        %v693 = vld [vmem:[%s692] ss:$8 sm:$0x3]
        %v695 = vperm.slane %v693, 0
        %v696 = vperm.slane %v693, 1
        %v699 = vmul.f32 %v690, %v695
        %v700 = vmul.f32 %v691, %v696
        %v701 = vld [vmem:[%s2] sm:$0xf]
        %703 = vset.pattern.permute.xlu0 24
        %704 = vperm.xlu0 %703, %v701
        %v705 = vpop.permute.xlu0 %704
        %v707 = vperm.slane %v699, 0
        %v708 = vperm.slane %v700, 0
        %v709 = vmul.f32 %v705, %v707
        %v710 = vmul.f32 %v705, %v708
        %v711 = vadd.f32 %v678, %v709
        %v712 = vadd.f32 %v679, %v710
        %713 = vset.pattern.permute.xlu0 25
        %714 = vperm.xlu0 %713, %v701
        %v715 = vpop.permute.xlu0 %714
        %v717 = vperm.slane %v699, 1
        %v718 = vperm.slane %v700, 1
        %v719 = vmul.f32 %v715, %v717
        %v720 = vmul.f32 %v715, %v718
        %v721 = vadd.f32 %v711, %v719
        %v722 = vadd.f32 %v712, %v720
        %723 = vset.pattern.permute.xlu0 26
        %724 = vperm.xlu0 %723, %v701
        %v725 = vpop.permute.xlu0 %724
        %v727 = vperm.slane %v699, 2
        %v728 = vperm.slane %v700, 2
        %v729 = vmul.f32 %v725, %v727
        %v730 = vmul.f32 %v725, %v728
        %v731 = vadd.f32 %v721, %v729
        %v732 = vadd.f32 %v722, %v730
        %733 = vset.pattern.permute.xlu0 27
        %734 = vperm.xlu0 %733, %v701
        %v735 = vpop.permute.xlu0 %734
        %v737 = vperm.slane %v699, 3
        %v738 = vperm.slane %v700, 3
        %v739 = vmul.f32 %v735, %v737
        %v740 = vmul.f32 %v735, %v738
        %v741 = vadd.f32 %v731, %v739
        %v742 = vadd.f32 %v732, %v740
        %743 = vst [vmem:[#allocation1] ss:$2 sm:$0xff] %v287
        %v744 = vld.sshfl [vmem:[#allocation1] sm:$0xff pattern:$0x75316420]
        %v745 = vld.sshfl [vmem:[#allocation1 + $0x8] sm:$0xff pattern:$0x75316420]
        %748 = vrot.lane.b32.xlu0 %v744, 112
        %v749 = vpop.permute.xlu0 %748
        %750 = vrot.lane.b32.xlu0 %v745, 112
        %v751 = vpop.permute.xlu0 %750
        %vm752 = vcmp.lt.s32.totalorder %v305, 112
        %v753 = vsel %vm752, %v749, %v751
        %v754 = vsel %vm752, %v751, %v749
        %s755 = scalar_lea.vmem [#allocation5], 7
        %v756 = vld [vmem:[%s755] ss:$8 sm:$0x3]
        %v758 = vperm.slane %v756, 0
        %v759 = vperm.slane %v756, 1
        %v762 = vmul.f32 %v753, %v758
        %v763 = vmul.f32 %v754, %v759
        %v764 = vld [vmem:[%s2] sm:$0xf]
        %766 = vset.pattern.permute.xlu0 28
        %767 = vperm.xlu0 %766, %v764
        %v768 = vpop.permute.xlu0 %767
        %v770 = vperm.slane %v762, 0
        %v771 = vperm.slane %v763, 0
        %v772 = vmul.f32 %v768, %v770
        %v773 = vmul.f32 %v768, %v771
        %v774 = vadd.f32 %v741, %v772
        %v775 = vadd.f32 %v742, %v773
        %776 = vset.pattern.permute.xlu0 29
        %777 = vperm.xlu0 %776, %v764
        %v778 = vpop.permute.xlu0 %777
        %v780 = vperm.slane %v762, 1
        %v781 = vperm.slane %v763, 1
        %v782 = vmul.f32 %v778, %v780
        %v783 = vmul.f32 %v778, %v781
        %v784 = vadd.f32 %v774, %v782
        %v785 = vadd.f32 %v775, %v783
        %786 = vset.pattern.permute.xlu0 30
        %787 = vperm.xlu0 %786, %v764
        %v788 = vpop.permute.xlu0 %787
        %v790 = vperm.slane %v762, 2
        %v791 = vperm.slane %v763, 2
        %v792 = vmul.f32 %v788, %v790
        %v793 = vmul.f32 %v788, %v791
        %v794 = vadd.f32 %v784, %v792
        %v795 = vadd.f32 %v785, %v793
        %796 = vset.pattern.permute.xlu0 31
        %797 = vperm.xlu0 %796, %v764
        %v798 = vpop.permute.xlu0 %797
        %v800 = vperm.slane %v762, 3
        %v801 = vperm.slane %v763, 3
        %v802 = vmul.f32 %v798, %v800
        %v803 = vmul.f32 %v798, %v801
        %v804 = vadd.f32 %v794, %v802
        %v805 = vadd.f32 %v795, %v803
        %806 = vst [vmem:[#allocation1] ss:$2 sm:$0xff] %v287
        %v807 = vld.sshfl [vmem:[#allocation1] sm:$0xff pattern:$0x75316420]
        %v808 = vld.sshfl [vmem:[#allocation1 + $0x8] sm:$0xff pattern:$0x75316420]
        %811 = vrot.lane.b32.xlu0 %v807, 111
        %v812 = vpop.permute.xlu0 %811
        %813 = vrot.lane.b32.xlu0 %v808, 111
        %v814 = vpop.permute.xlu0 %813
        %vm815 = vcmp.lt.s32.totalorder %v305, 111
        %v816 = vsel %vm815, %v812, %v814
        %v817 = vsel %vm815, %v814, %v812
        %s818 = scalar_lea.vmem [#allocation5], 16
        %v819 = vld [vmem:[%s818] ss:$8 sm:$0x3]
        %v821 = vperm.slane %v819, 0
        %v822 = vperm.slane %v819, 1
        %v825 = vmul.f32 %v816, %v821
        %v826 = vmul.f32 %v817, %v822
        %v827 = vld [vmem:[%s2] sm:$0xf]
        %829 = vset.pattern.permute.xlu0 32
        %830 = vperm.xlu0 %829, %v827
        %v831 = vpop.permute.xlu0 %830
        %v833 = vperm.slane %v825, 0
        %v834 = vperm.slane %v826, 0
        %v835 = vmul.f32 %v831, %v833
        %v836 = vmul.f32 %v831, %v834
        %v837 = vadd.f32 %v804, %v835
        %v838 = vadd.f32 %v805, %v836
        %839 = vset.pattern.permute.xlu0 33
        %840 = vperm.xlu0 %839, %v827
        %v841 = vpop.permute.xlu0 %840
        %v843 = vperm.slane %v825, 1
        %v844 = vperm.slane %v826, 1
        %v845 = vmul.f32 %v841, %v843
        %v846 = vmul.f32 %v841, %v844
        %v847 = vadd.f32 %v837, %v845
        %v848 = vadd.f32 %v838, %v846
        %849 = vset.pattern.permute.xlu0 34
        %850 = vperm.xlu0 %849, %v827
        %v851 = vpop.permute.xlu0 %850
        %v853 = vperm.slane %v825, 2
        %v854 = vperm.slane %v826, 2
        %v855 = vmul.f32 %v851, %v853
        %v856 = vmul.f32 %v851, %v854
        %v857 = vadd.f32 %v847, %v855
        %v858 = vadd.f32 %v848, %v856
        %859 = vset.pattern.permute.xlu0 35
        %860 = vperm.xlu0 %859, %v827
        %v861 = vpop.permute.xlu0 %860
        %v863 = vperm.slane %v825, 3
        %v864 = vperm.slane %v826, 3
        %v865 = vmul.f32 %v861, %v863
        %v866 = vmul.f32 %v861, %v864
        %v867 = vadd.f32 %v857, %v865
        %v868 = vadd.f32 %v858, %v866
        %v869 = vmax.f32 %v867, 0.0
        %v870 = vmax.f32 %v868, 0.0
        %v871 = vld [vmem:[%s5] sm:$0xf]
        %873 = vset.pattern.permute.xlu0 0
        %874 = vperm.xlu0 %873, %v871
        %v875 = vpop.permute.xlu0 %874
        %877 = vrot.lane.b32.xlu0 %v869, 17
        %v878 = vpop.permute.xlu0 %877
        %879 = vrot.lane.b32.xlu0 %v870, 17
        %v880 = vpop.permute.xlu0 %879
        %v881 = vsel %vm306, %v878, %v880
        %v882 = vsel %vm306, %v880, %v878
        %v883 = vmul.f32 %v882, %v311
        %v884 = vmul.f32 %v881, %v312
        %v885 = vld [vmem:[%s4] sm:$0xf]
        %887 = vset.pattern.permute.xlu0 0
        %888 = vperm.xlu0 %887, %v885
        %v889 = vpop.permute.xlu0 %888
        %v891 = vperm.slane %v883, 0
        %v892 = vperm.slane %v884, 0
        %v893 = vmul.f32 %v889, %v891
        %v894 = vmul.f32 %v889, %v892
        %v895 = vadd.f32 %v875, %v893
        %v896 = vadd.f32 %v875, %v894
        %897 = vset.pattern.permute.xlu0 1
        %898 = vperm.xlu0 %897, %v885
        %v899 = vpop.permute.xlu0 %898
        %v901 = vperm.slane %v883, 1
        %v902 = vperm.slane %v884, 1
        %v903 = vmul.f32 %v899, %v901
        %v904 = vmul.f32 %v899, %v902
        %v905 = vadd.f32 %v895, %v903
        %v906 = vadd.f32 %v896, %v904
        %907 = vset.pattern.permute.xlu0 2
        %908 = vperm.xlu0 %907, %v885
        %v909 = vpop.permute.xlu0 %908
        %v911 = vperm.slane %v883, 2
        %v912 = vperm.slane %v884, 2
        %v913 = vmul.f32 %v909, %v911
        %v914 = vmul.f32 %v909, %v912
        %v915 = vadd.f32 %v905, %v913
        %v916 = vadd.f32 %v906, %v914
        %917 = vset.pattern.permute.xlu0 3
        %918 = vperm.xlu0 %917, %v885
        %v919 = vpop.permute.xlu0 %918
        %v921 = vperm.slane %v883, 3
        %v922 = vperm.slane %v884, 3
        %v923 = vmul.f32 %v919, %v921
        %v924 = vmul.f32 %v919, %v922
        %v925 = vadd.f32 %v915, %v923
        %v926 = vadd.f32 %v916, %v924
        %927 = vrot.lane.b32.xlu0 %v869, 16
        %v928 = vpop.permute.xlu0 %927
        %929 = vrot.lane.b32.xlu0 %v870, 16
        %v930 = vpop.permute.xlu0 %929
        %v931 = vsel %vm368, %v928, %v930
        %v932 = vsel %vm368, %v930, %v928
        %v933 = vmul.f32 %v932, %v374
        %v934 = vmul.f32 %v931, %v375
        %935 = vset.pattern.permute.xlu0 4
        %936 = vperm.xlu0 %935, %v885
        %v937 = vpop.permute.xlu0 %936
        %v939 = vperm.slane %v933, 0
        %v940 = vperm.slane %v934, 0
        %v941 = vmul.f32 %v937, %v939
        %v942 = vmul.f32 %v937, %v940
        %v943 = vadd.f32 %v925, %v941
        %v944 = vadd.f32 %v926, %v942
        %945 = vset.pattern.permute.xlu0 5
        %946 = vperm.xlu0 %945, %v885
        %v947 = vpop.permute.xlu0 %946
        %v949 = vperm.slane %v933, 1
        %v950 = vperm.slane %v934, 1
        %v951 = vmul.f32 %v947, %v949
        %v952 = vmul.f32 %v947, %v950
        %v953 = vadd.f32 %v943, %v951
        %v954 = vadd.f32 %v944, %v952
        %955 = vset.pattern.permute.xlu0 6
        %956 = vperm.xlu0 %955, %v885
        %v957 = vpop.permute.xlu0 %956
        %v959 = vperm.slane %v933, 2
        %v960 = vperm.slane %v934, 2
        %v961 = vmul.f32 %v957, %v959
        %v962 = vmul.f32 %v957, %v960
        %v963 = vadd.f32 %v953, %v961
        %v964 = vadd.f32 %v954, %v962
        %965 = vset.pattern.permute.xlu0 7
        %966 = vperm.xlu0 %965, %v885
        %v967 = vpop.permute.xlu0 %966
        %v969 = vperm.slane %v933, 3
        %v970 = vperm.slane %v934, 3
        %v971 = vmul.f32 %v967, %v969
        %v972 = vmul.f32 %v967, %v970
        %v973 = vadd.f32 %v963, %v971
        %v974 = vadd.f32 %v964, %v972
        %975 = vrot.lane.b32.xlu0 %v869, 15
        %v976 = vpop.permute.xlu0 %975
        %977 = vrot.lane.b32.xlu0 %v870, 15
        %v978 = vpop.permute.xlu0 %977
        %v979 = vsel %vm431, %v976, %v978
        %v980 = vsel %vm431, %v978, %v976
        %v981 = vmul.f32 %v980, %v437
        %v982 = vmul.f32 %v979, %v438
        %983 = vset.pattern.permute.xlu0 8
        %984 = vperm.xlu0 %983, %v885
        %v985 = vpop.permute.xlu0 %984
        %v987 = vperm.slane %v981, 0
        %v988 = vperm.slane %v982, 0
        %v989 = vmul.f32 %v985, %v987
        %v990 = vmul.f32 %v985, %v988
        %v991 = vadd.f32 %v973, %v989
        %v992 = vadd.f32 %v974, %v990
        %993 = vset.pattern.permute.xlu0 9
        %994 = vperm.xlu0 %993, %v885
        %v995 = vpop.permute.xlu0 %994
        %v997 = vperm.slane %v981, 1
        %v998 = vperm.slane %v982, 1
        %v999 = vmul.f32 %v995, %v997
        %v1000 = vmul.f32 %v995, %v998
        %v1001 = vadd.f32 %v991, %v999
        %v1002 = vadd.f32 %v992, %v1000
        %1003 = vset.pattern.permute.xlu0 10
        %1004 = vperm.xlu0 %1003, %v885
        %v1005 = vpop.permute.xlu0 %1004
        %v1007 = vperm.slane %v981, 2
        %v1008 = vperm.slane %v982, 2
        %v1009 = vmul.f32 %v1005, %v1007
        %v1010 = vmul.f32 %v1005, %v1008
        %v1011 = vadd.f32 %v1001, %v1009
        %v1012 = vadd.f32 %v1002, %v1010
        %1013 = vset.pattern.permute.xlu0 11
        %1014 = vperm.xlu0 %1013, %v885
        %v1015 = vpop.permute.xlu0 %1014
        %v1017 = vperm.slane %v981, 3
        %v1018 = vperm.slane %v982, 3
        %v1019 = vmul.f32 %v1015, %v1017
        %v1020 = vmul.f32 %v1015, %v1018
        %v1021 = vadd.f32 %v1011, %v1019
        %v1022 = vadd.f32 %v1012, %v1020
        %1023 = vrot.lane.b32.xlu0 %v869, 1
        %v1024 = vpop.permute.xlu0 %1023
        %1025 = vrot.lane.b32.xlu0 %v870, 1
        %v1026 = vpop.permute.xlu0 %1025
        %v1027 = vsel %vm494, %v1024, %v1026
        %v1028 = vsel %vm494, %v1026, %v1024
        %v1029 = vmul.f32 %v1028, %v500
        %v1030 = vmul.f32 %v1027, %v501
        %1031 = vset.pattern.permute.xlu0 12
        %1032 = vperm.xlu0 %1031, %v885
        %v1033 = vpop.permute.xlu0 %1032
        %v1035 = vperm.slane %v1029, 0
        %v1036 = vperm.slane %v1030, 0
        %v1037 = vmul.f32 %v1033, %v1035
        %v1038 = vmul.f32 %v1033, %v1036
        %v1039 = vadd.f32 %v1021, %v1037
        %v1040 = vadd.f32 %v1022, %v1038
        %1041 = vset.pattern.permute.xlu0 13
        %1042 = vperm.xlu0 %1041, %v885
        %v1043 = vpop.permute.xlu0 %1042
        %v1045 = vperm.slane %v1029, 1
        %v1046 = vperm.slane %v1030, 1
        %v1047 = vmul.f32 %v1043, %v1045
        %v1048 = vmul.f32 %v1043, %v1046
        %v1049 = vadd.f32 %v1039, %v1047
        %v1050 = vadd.f32 %v1040, %v1048
        %1051 = vset.pattern.permute.xlu0 14
        %1052 = vperm.xlu0 %1051, %v885
        %v1053 = vpop.permute.xlu0 %1052
        %v1055 = vperm.slane %v1029, 2
        %v1056 = vperm.slane %v1030, 2
        %v1057 = vmul.f32 %v1053, %v1055
        %v1058 = vmul.f32 %v1053, %v1056
        %v1059 = vadd.f32 %v1049, %v1057
        %v1060 = vadd.f32 %v1050, %v1058
        %1061 = vset.pattern.permute.xlu0 15
        %1062 = vperm.xlu0 %1061, %v885
        %v1063 = vpop.permute.xlu0 %1062
        %v1065 = vperm.slane %v1029, 3
        %v1066 = vperm.slane %v1030, 3
        %v1067 = vmul.f32 %v1063, %v1065
        %v1068 = vmul.f32 %v1063, %v1066
        %v1069 = vadd.f32 %v1059, %v1067
        %v1070 = vadd.f32 %v1060, %v1068
        %v1071 = vmul.f32 %v869, %v551
        %v1072 = vmul.f32 %v870, %v552
        %1073 = vset.pattern.permute.xlu0 16
        %1074 = vperm.xlu0 %1073, %v885
        %v1075 = vpop.permute.xlu0 %1074
        %v1077 = vperm.slane %v1071, 0
        %v1078 = vperm.slane %v1072, 0
        %v1079 = vmul.f32 %v1075, %v1077
        %v1080 = vmul.f32 %v1075, %v1078
        %v1081 = vadd.f32 %v1069, %v1079
        %v1082 = vadd.f32 %v1070, %v1080
        %1083 = vset.pattern.permute.xlu0 17
        %1084 = vperm.xlu0 %1083, %v885
        %v1085 = vpop.permute.xlu0 %1084
        %v1087 = vperm.slane %v1071, 1
        %v1088 = vperm.slane %v1072, 1
        %v1089 = vmul.f32 %v1085, %v1087
        %v1090 = vmul.f32 %v1085, %v1088
        %v1091 = vadd.f32 %v1081, %v1089
        %v1092 = vadd.f32 %v1082, %v1090
        %1093 = vset.pattern.permute.xlu0 18
        %1094 = vperm.xlu0 %1093, %v885
        %v1095 = vpop.permute.xlu0 %1094
        %v1097 = vperm.slane %v1071, 2
        %v1098 = vperm.slane %v1072, 2
        %v1099 = vmul.f32 %v1095, %v1097
        %v1100 = vmul.f32 %v1095, %v1098
        %v1101 = vadd.f32 %v1091, %v1099
        %v1102 = vadd.f32 %v1092, %v1100
        %1103 = vset.pattern.permute.xlu0 19
        %1104 = vperm.xlu0 %1103, %v885
        %v1105 = vpop.permute.xlu0 %1104
        %v1107 = vperm.slane %v1071, 3
        %v1108 = vperm.slane %v1072, 3
        %v1109 = vmul.f32 %v1105, %v1107
        %v1110 = vmul.f32 %v1105, %v1108
        %v1111 = vadd.f32 %v1101, %v1109
        %v1112 = vadd.f32 %v1102, %v1110
        %1113 = vrot.lane.b32.xlu0 %v869, 127
        %v1114 = vpop.permute.xlu0 %1113
        %1115 = vrot.lane.b32.xlu0 %v870, 127
        %v1116 = vpop.permute.xlu0 %1115
        %v1117 = vsel %vm626, %v1114, %v1116
        %v1118 = vsel %vm626, %v1116, %v1114
        %v1119 = vmul.f32 %v1117, %v632
        %v1120 = vmul.f32 %v1118, %v633
        %1121 = vset.pattern.permute.xlu0 20
        %1122 = vperm.xlu0 %1121, %v885
        %v1123 = vpop.permute.xlu0 %1122
        %v1125 = vperm.slane %v1119, 0
        %v1126 = vperm.slane %v1120, 0
        %v1127 = vmul.f32 %v1123, %v1125
        %v1128 = vmul.f32 %v1123, %v1126
        %v1129 = vadd.f32 %v1111, %v1127
        %v1130 = vadd.f32 %v1112, %v1128
        %1131 = vset.pattern.permute.xlu0 21
        %1132 = vperm.xlu0 %1131, %v885
        %v1133 = vpop.permute.xlu0 %1132
        %v1135 = vperm.slane %v1119, 1
        %v1136 = vperm.slane %v1120, 1
        %v1137 = vmul.f32 %v1133, %v1135
        %v1138 = vmul.f32 %v1133, %v1136
        %v1139 = vadd.f32 %v1129, %v1137
        %v1140 = vadd.f32 %v1130, %v1138
        %1141 = vset.pattern.permute.xlu0 22
        %1142 = vperm.xlu0 %1141, %v885
        %v1143 = vpop.permute.xlu0 %1142
        %v1145 = vperm.slane %v1119, 2
        %v1146 = vperm.slane %v1120, 2
        %v1147 = vmul.f32 %v1143, %v1145
        %v1148 = vmul.f32 %v1143, %v1146
        %v1149 = vadd.f32 %v1139, %v1147
        %v1150 = vadd.f32 %v1140, %v1148
        %1151 = vset.pattern.permute.xlu0 23
        %1152 = vperm.xlu0 %1151, %v885
        %v1153 = vpop.permute.xlu0 %1152
        %v1155 = vperm.slane %v1119, 3
        %v1156 = vperm.slane %v1120, 3
        %v1157 = vmul.f32 %v1153, %v1155
        %v1158 = vmul.f32 %v1153, %v1156
        %v1159 = vadd.f32 %v1149, %v1157
        %v1160 = vadd.f32 %v1150, %v1158
        %1161 = vrot.lane.b32.xlu0 %v869, 113
        %v1162 = vpop.permute.xlu0 %1161
        %1163 = vrot.lane.b32.xlu0 %v870, 113
        %v1164 = vpop.permute.xlu0 %1163
        %v1165 = vsel %vm689, %v1162, %v1164
        %v1166 = vsel %vm689, %v1164, %v1162
        %v1167 = vmul.f32 %v1165, %v695
        %v1168 = vmul.f32 %v1166, %v696
        %1169 = vset.pattern.permute.xlu0 24
        %1170 = vperm.xlu0 %1169, %v885
        %v1171 = vpop.permute.xlu0 %1170
        %v1173 = vperm.slane %v1167, 0
        %v1174 = vperm.slane %v1168, 0
        %v1175 = vmul.f32 %v1171, %v1173
        %v1176 = vmul.f32 %v1171, %v1174
        %v1177 = vadd.f32 %v1159, %v1175
        %v1178 = vadd.f32 %v1160, %v1176
        %1179 = vset.pattern.permute.xlu0 25
        %1180 = vperm.xlu0 %1179, %v885
        %v1181 = vpop.permute.xlu0 %1180
        %v1183 = vperm.slane %v1167, 1
        %v1184 = vperm.slane %v1168, 1
        %v1185 = vmul.f32 %v1181, %v1183
        %v1186 = vmul.f32 %v1181, %v1184
        %v1187 = vadd.f32 %v1177, %v1185
        %v1188 = vadd.f32 %v1178, %v1186
        %1189 = vset.pattern.permute.xlu0 26
        %1190 = vperm.xlu0 %1189, %v885
        %v1191 = vpop.permute.xlu0 %1190
        %v1193 = vperm.slane %v1167, 2
        %v1194 = vperm.slane %v1168, 2
        %v1195 = vmul.f32 %v1191, %v1193
        %v1196 = vmul.f32 %v1191, %v1194
        %v1197 = vadd.f32 %v1187, %v1195
        %v1198 = vadd.f32 %v1188, %v1196
        %1199 = vset.pattern.permute.xlu0 27
        %1200 = vperm.xlu0 %1199, %v885
        %v1201 = vpop.permute.xlu0 %1200
        %v1203 = vperm.slane %v1167, 3
        %v1204 = vperm.slane %v1168, 3
        %v1205 = vmul.f32 %v1201, %v1203
        %v1206 = vmul.f32 %v1201, %v1204
        %v1207 = vadd.f32 %v1197, %v1205
        %v1208 = vadd.f32 %v1198, %v1206
        %1209 = vrot.lane.b32.xlu0 %v869, 112
        %v1210 = vpop.permute.xlu0 %1209
        %1211 = vrot.lane.b32.xlu0 %v870, 112
        %v1212 = vpop.permute.xlu0 %1211
        %v1213 = vsel %vm752, %v1210, %v1212
        %v1214 = vsel %vm752, %v1212, %v1210
        %v1215 = vmul.f32 %v1213, %v758
        %v1216 = vmul.f32 %v1214, %v759
        %1217 = vset.pattern.permute.xlu0 28
        %1218 = vperm.xlu0 %1217, %v885
        %v1219 = vpop.permute.xlu0 %1218
        %v1221 = vperm.slane %v1215, 0
        %v1222 = vperm.slane %v1216, 0
        %v1223 = vmul.f32 %v1219, %v1221
        %v1224 = vmul.f32 %v1219, %v1222
        %v1225 = vadd.f32 %v1207, %v1223
        %v1226 = vadd.f32 %v1208, %v1224
        %1227 = vset.pattern.permute.xlu0 29
        %1228 = vperm.xlu0 %1227, %v885
        %v1229 = vpop.permute.xlu0 %1228
        %v1231 = vperm.slane %v1215, 1
        %v1232 = vperm.slane %v1216, 1
        %v1233 = vmul.f32 %v1229, %v1231
        %v1234 = vmul.f32 %v1229, %v1232
        %v1235 = vadd.f32 %v1225, %v1233
        %v1236 = vadd.f32 %v1226, %v1234
        %1237 = vset.pattern.permute.xlu0 30
        %1238 = vperm.xlu0 %1237, %v885
        %v1239 = vpop.permute.xlu0 %1238
        %v1241 = vperm.slane %v1215, 2
        %v1242 = vperm.slane %v1216, 2
        %v1243 = vmul.f32 %v1239, %v1241
        %v1244 = vmul.f32 %v1239, %v1242
        %v1245 = vadd.f32 %v1235, %v1243
        %v1246 = vadd.f32 %v1236, %v1244
        %1247 = vset.pattern.permute.xlu0 31
        %1248 = vperm.xlu0 %1247, %v885
        %v1249 = vpop.permute.xlu0 %1248
        %v1251 = vperm.slane %v1215, 3
        %v1252 = vperm.slane %v1216, 3
        %v1253 = vmul.f32 %v1249, %v1251
        %v1254 = vmul.f32 %v1249, %v1252
        %v1255 = vadd.f32 %v1245, %v1253
        %v1256 = vadd.f32 %v1246, %v1254
        %1257 = vrot.lane.b32.xlu0 %v869, 111
        %v1258 = vpop.permute.xlu0 %1257
        %1259 = vrot.lane.b32.xlu0 %v870, 111
        %v1260 = vpop.permute.xlu0 %1259
        %v1261 = vsel %vm815, %v1258, %v1260
        %v1262 = vsel %vm815, %v1260, %v1258
        %v1263 = vmul.f32 %v1261, %v821
        %v1264 = vmul.f32 %v1262, %v822
        %1265 = vset.pattern.permute.xlu0 32
        %1266 = vperm.xlu0 %1265, %v885
        %v1267 = vpop.permute.xlu0 %1266
        %v1269 = vperm.slane %v1263, 0
        %v1270 = vperm.slane %v1264, 0
        %v1271 = vmul.f32 %v1267, %v1269
        %v1272 = vmul.f32 %v1267, %v1270
        %v1273 = vadd.f32 %v1255, %v1271
        %v1274 = vadd.f32 %v1256, %v1272
        %1275 = vset.pattern.permute.xlu0 33
        %1276 = vperm.xlu0 %1275, %v885
        %v1277 = vpop.permute.xlu0 %1276
        %v1279 = vperm.slane %v1263, 1
        %v1280 = vperm.slane %v1264, 1
        %v1281 = vmul.f32 %v1277, %v1279
        %v1282 = vmul.f32 %v1277, %v1280
        %v1283 = vadd.f32 %v1273, %v1281
        %v1284 = vadd.f32 %v1274, %v1282
        %1285 = vset.pattern.permute.xlu0 34
        %1286 = vperm.xlu0 %1285, %v885
        %v1287 = vpop.permute.xlu0 %1286
        %v1289 = vperm.slane %v1263, 2
        %v1290 = vperm.slane %v1264, 2
        %v1291 = vmul.f32 %v1287, %v1289
        %v1292 = vmul.f32 %v1287, %v1290
        %v1293 = vadd.f32 %v1283, %v1291
        %v1294 = vadd.f32 %v1284, %v1292
        %1295 = vset.pattern.permute.xlu0 35
        %1296 = vperm.xlu0 %1295, %v885
        %v1297 = vpop.permute.xlu0 %1296
        %v1299 = vperm.slane %v1263, 3
        %v1300 = vperm.slane %v1264, 3
        %v1301 = vmul.f32 %v1297, %v1299
        %v1302 = vmul.f32 %v1297, %v1300
        %v1303 = vadd.f32 %v1293, %v1301
        %v1304 = vadd.f32 %v1294, %v1302
        %v1305 = vmax.f32 %v1303, 0.0
        %v1306 = vmax.f32 %v1304, 0.0
        %v1309 = vrot.slane %v1306, 4
        %v1310 = vsel %vm556, %v1305, %v1309
        %1312 = vst [vmem:[%s286] sm:$0xff] %v1310
        %s1313 = sand.u32 %s163, 1
        %s1314 = scalar_lea.sflag [#allocation4], %s1313
        %s1315 = sand.u32 %s163, 1
        %s1316 = smul.addr %s1315, 8
        %s1317 = scalar_lea.vmem [#allocation7], %s1316
        // Predicated region
        $region53: #{tpu_custom_call.1} parent=43 // pred_check
          %p1318 = pneg %p173
        $region54: #{tpu_custom_call.1} parent=43 // pred_check_branch
          %1320 = sbr.rel (%p1318) target = $region56
        $region55: #{tpu_custom_call.1} parent=43 // pred_region
          %1322 = vsyncadd %s1314, 0
          %s1323 = smul.addr %s24, 2
          %s1324 = smul.addr %s1323, 4
          %s1325 = scalar_lea.hbm %s6, %s1324
          %s1327 = sshll.u32 %s1317, 4
          %s1328 = int_to_ptr.vmem [resolvable:$true] %s1327
          %s1329 = sshll.u32 %s1325, 4
          %s1330 = int_to_ptr.hbm [resolvable:$true] %s1329
          %1332 = dma.vmem_to_hbm [thread:$0]  %s1328, 128, %s1330, %s1314
        $region56: #{tpu_custom_call.1} parent=43 // pred_fallthru
          _
      $region44: #{tpu_custom_call.1} parent=5 // pred_fallthru
        _
      %p1333 = scmp.le.s32.totalorder 2, %s19
      // Predicated region
      $region57: #{tpu_custom_call.1} parent=5 // pred_check
        %p1334 = pneg %p1333
      $region58: #{tpu_custom_call.1} parent=5 // pred_check_branch
        %1336 = sbr.rel (%p1334) target = $region60
      $region59: #{tpu_custom_call.1} parent=5 // pred_region
        %s1337 = ssub.s32 %s19, 2
        // Predicated region
        $region61: #{tpu_custom_call.1} parent=59 // pred_check
          %p1338 = pneg %p179
        $region62: #{tpu_custom_call.1} parent=59 // pred_check_branch
          %1340 = sbr.rel (%p1338) target = $region64
        $region63: #{tpu_custom_call.1} parent=59 // pred_region
          %s1341 = sand.u32 %s164, 1
          %s1342 = scalar_lea.sflag [#allocation4], %s1341
          %s1343 = sand.u32 %s164, 1
          %s1344 = smul.addr %s1343, 8
          %s1345 = scalar_lea.vmem [#allocation7], %s1344
          %1347 = dma.done %s1342, 128
        $region64: #{tpu_custom_call.1} parent=59 // pred_fallthru
          _
      $region60: #{tpu_custom_call.1} parent=5 // pred_fallthru
        _
    $region6: #{tpu_custom_call.1} parent=1 // loop_footer
      %s23 = sadd.s32 1, %s19
    $region7: #{tpu_custom_call.1} parent=1 // loop_footer_branch
      %18 = sbr.rel target = $region3
    $region8: #{tpu_custom_call.1} parent=1 // loop_exit
      _
    %1348 = vsyncpa [#allocation3], 1
    %s1349 = scalar_lea.sflag [#allocation3], 1
    %1350 = vsyncpa %s1349, 1
    %1351 = vsyncpa [#allocation6], 1
    %1352 = vsyncpa [#allocation4], 1
    %s1353 = scalar_lea.sflag [#allocation4], 1
    %1354 = vsyncpa %s1353, 1

</llo_original>
